<compile_context>
chip_gen: v7x
topology: tpu7x:2x2x1
jax: 0.10.0
libtpu: 0.0.40
codegen_flags: <defaults>
</compile_context>

<pallas_src>
import jax
import jax.numpy as jnp
from jax.experimental import pallas as pl
from jax.experimental.pallas import tpu as pltpu


def _conv1x1_kernel(x_ref, w_ref, o_ref):
    # x_ref: (C_in, HW) pixels for one batch element (channel-major, no transpose)
    # w_ref: (tco, C_in) bf16 slice of the weight matrix (pre-cast outside)
    # o_ref: (tco, HW) f32 output slice
    x = x_ref[...].astype(jnp.bfloat16)
    o_ref[...] = jnp.dot(w_ref[...], x,
                         preferred_element_type=jnp.float32).astype(o_ref.dtype)


def _num_tensorcores() -> int:
    """TensorCores per chip: 2 on v7x, 1 on v5e/v6e. Defensive fallback = 1."""
    try:
        kind = jax.devices()[0].device_kind.lower()
    except Exception:
        return 1
    return 2 if "v7" in kind else 1


def prepare_weight(weight_oihw):
    """One-time weight prep: (C_out, C_in, 1, 1) f32 -> (C_out, C_in) bf16.

    Do this once and reuse across calls; a per-call wrapper cast would be a
    separate XLA op and save nothing.
    """
    C_out, C_in = weight_oihw.shape[0], weight_oihw.shape[1]
    assert weight_oihw.shape == (C_out, C_in, 1, 1)
    return weight_oihw.reshape(C_out, C_in).astype(jnp.bfloat16)


def conv2d_1x1(x_nchw, w_mat_bf16):
    """1x1 conv, stride 1, no bias. x_nchw: (N, C_in, H, W); w_mat_bf16: (C_out, C_in)."""
    N, C_in, H, W = x_nchw.shape
    C_out = w_mat_bf16.shape[0]
    assert w_mat_bf16.shape == (C_out, C_in)
    HW = H * W

    # Zero-copy reshape in the native NCHW layout (no transposes).
    x_mat = x_nchw.reshape(N, C_in, HW)  # (N, C_in, HW)

    # Split C_out across TensorCores only where it helps: 2 on v7x, else 1.
    n_tc = _num_tensorcores()
    n_co = n_tc if (n_tc > 1 and C_out % (8 * n_tc) == 0) else 1
    tco = C_out // n_co

    x_item = jnp.dtype(x_nchw.dtype).itemsize
    w_item = jnp.dtype(w_mat_bf16.dtype).itemsize
    flops = 2 * N * C_out * C_in * HW
    bytes_accessed = (x_mat.size * x_item
                      + w_mat_bf16.size * w_item
                      + N * C_out * HW * x_item)

    out = pl.pallas_call(
        _conv1x1_kernel,
        out_shape=jax.ShapeDtypeStruct((N, C_out, HW), x_nchw.dtype),
        grid_spec=pltpu.PrefetchScalarGridSpec(
            num_scalar_prefetch=0,
            # co is the LEADING axis so megacore sharding on v7x splits it;
            # with co outer / n inner the weight block only changes on the
            # outer axis and is never re-DMA'd per batch element.
            grid=(n_co, N),
            in_specs=[
                # Full (C_in, HW) slab per batch element.
                pl.BlockSpec((None, C_in, HW), lambda co, n: (n, 0, 0)),
                # Weight slice per C_out block; resident across the inner n axis.
                pl.BlockSpec((tco, C_in), lambda co, n: (co, 0)),
            ],
            out_specs=pl.BlockSpec((None, tco, HW), lambda co, n: (n, co, 0)),
        ),
        compiler_params=pltpu.CompilerParams(
            dimension_semantics=("parallel", "parallel"),
        ),
        cost_estimate=pl.CostEstimate(
            flops=flops, transcendentals=0, bytes_accessed=bytes_accessed),
    )(x_mat, w_mat_bf16)

    # (N, C_out, HW) -> NCHW (pure reshape, zero data movement).
    return out.reshape(N, C_out, H, W)


if __name__ == "__main__":
    key = jax.random.PRNGKey(0)
    kx, kw = jax.random.split(key)

    # Shapes implied by the module: input (1, 128, 28, 28), weight (512, 128, 1, 1).
    x44 = jax.random.normal(kx, (1, 128, 28, 28), dtype=jnp.float32)
    w13 = jax.random.normal(kw, (512, 128, 1, 1), dtype=jnp.float32) * 0.05

    w_prepped = prepare_weight(w13)  # one-time bf16 cast, reused across calls
    y = conv2d_1x1(x44, w_prepped)
    jax.block_until_ready(y)

    # Reference: f32 lax conv (1x1 conv == per-pixel matmul).
    ref = jax.lax.conv_general_dilated(
        x44, w13, window_strides=(1, 1), padding="VALID",
        dimension_numbers=("NCHW", "OIHW", "NCHW"),
    )
    assert y.shape == (1, 512, 28, 28), y.shape
    # bf16 MXU inputs with f32 accumulation -> loosened tolerance vs f32 reference.
    assert jnp.allclose(y, ref, atol=5e-2, rtol=5e-2), "mismatch vs reference conv"

    print("KERNEL_OK")
</pallas_src>

<mosaic_0001>
module attributes {stable_mosaic.version = 11 : i64} {
  func.func @_conv1x1_kernel(%arg0: i32, %arg1: i32, %arg2: memref<1x128x784xf32, #tpu.memory_space<vmem>>, %arg3: memref<512x128xbf16, #tpu.memory_space<vmem>>, %arg4: memref<1x512x784xf32, #tpu.memory_space<vmem>>) attributes {dimension_semantics = [#tpu.dimension_semantics<parallel>, #tpu.dimension_semantics<parallel>], iteration_bounds = array<i64: 1, 1>, scalar_prefetch = 0 : i64, scratch_operands = 0 : i64, tpu.core_type = #tpu.core_type<tc>, window_params = [{transform_indices = @transform_0, window_bounds = array<i64: 1, 128, 784>}, {transform_indices = @transform_1, window_bounds = array<i64: 512, 128>}, {transform_indices = @transform_2, window_bounds = array<i64: 1, 512, 784>}]} {
    %c0 = arith.constant 0 : index
    %c0_0 = arith.constant 0 : index
    %c0_1 = arith.constant 0 : index
    %0 = vector.load %arg2[%c0, %c0_0, %c0_1] : memref<1x128x784xf32, #tpu.memory_space<vmem>>, vector<1x128x784xf32>
    %1 = vector.shape_cast %0 : vector<1x128x784xf32> to vector<128x784xf32>
    %2 = arith.truncf %1 : vector<128x784xf32> to vector<128x784xbf16>
    %c0_2 = arith.constant 0 : index
    %c0_3 = arith.constant 0 : index
    %3 = vector.load %arg3[%c0_2, %c0_3] : memref<512x128xbf16, #tpu.memory_space<vmem>>, vector<512x128xbf16>
    %cst = arith.constant dense<0.000000e+00> : vector<512x784xf32>
    %4 = tpu.matmul %3, %2, %cst {dimension_numbers = #tpu.dot_dimension_numbers<[1], [0], [0], [1], [0, 0, 1, 1], [], []>} : vector<512x128xbf16>, vector<128x784xbf16>, vector<512x784xf32> -> vector<512x784xf32>
    %c0_4 = arith.constant 0 : index
    %c0_5 = arith.constant 0 : index
    %c0_6 = arith.constant 0 : index
    %5 = vector.load %arg4[%c0_4, %c0_5, %c0_6] : memref<1x512x784xf32, #tpu.memory_space<vmem>>, vector<1x512x784xf32>
    %6 = vector.shape_cast %5 : vector<1x512x784xf32> to vector<512x784xf32>
    %7 = vector.shape_cast %4 : vector<512x784xf32> to vector<1x512x784xf32>
    tpu.vector_store %arg4[%c0_4, %c0_5, %c0_6], %7 {strides = array<i32>} : memref<1x512x784xf32, #tpu.memory_space<vmem>>, vector<1x512x784xf32>,
    return
  }
  func.func @transform_0(%arg0: i32, %arg1: i32) -> (i32, i32, i32) {
    %c0_i32 = arith.constant 0 : i32
    %c0_i32_0 = arith.constant 0 : i32
    %c0_i32_1 = arith.constant 0 : i32
    return %arg1, %c0_i32, %c0_i32_0 : i32, i32, i32
  }
  func.func @transform_1(%arg0: i32, %arg1: i32) -> (i32, i32) {
    %c0_i32 = arith.constant 0 : i32
    %c0_i32_0 = arith.constant 0 : i32
    return %arg0, %c0_i32 : i32, i32
  }
  func.func @transform_2(%arg0: i32, %arg1: i32) -> (i32, i32, i32) {
    %c0_i32 = arith.constant 0 : i32
    %c0_i32_0 = arith.constant 0 : i32
    return %arg1, %arg0, %c0_i32 : i32, i32, i32
  }
}

</mosaic_0001>

<llo_original>
// kernel: tpu_custom_call.1
$region0: #{tpu_custom_call.1}
  #allocation0 [shape = 'u32[]', space=smem, size = 0x4, offset = 0x4, fixed_abs, tag = 'smem constant byte address 0x4 - core index']
  #allocation1 [shape = 'u32[144,128]{1,0:T(1,128)}', space=vmem, size = 0x12000, scoped, tag = 'internal scratch']
  %s0 = inlined_call_operand.vmem [shape: f32[1,128,784], index: 0, kind: input, shape index: {}]
  %s1 = inlined_call_operand.hbm [shape: bf16[512,128], index: 1, kind: input, shape index: {}]
  %s2 = inlined_call_operand.vmem [shape: f32[1,512,784], index: 2, kind: output, shape index: {}]
  %s3 = sld [smem:[#allocation0]]
  $region22: #{tpu_custom_call.1} parent=0
    _
  %s5 = ssub.s32 1, %s3
  %s6 = scalar_select 0, %s5, %s3
  $region1: #{tpu_custom_call.1} parent=0
    #allocation2 [shape = 'u8[131072]{0}', space=vmem, size = 0x20000, scoped, tag = 'input window, operand 1, single buffered']
    #allocation3 [shape = 's32[1]{0}', space=sflag, size = 0x4, scoped, tag = 'scoped memory for tpu_custom_call.1']
    %7 = vsyncpa [#allocation3], 0
    // Predicated region
    $region2: #{tpu_custom_call.1} parent=1 // pred_check
      _
    $region3: #{tpu_custom_call.1} parent=1 // pred_check_branch
      %9 = sbr.rel (0) target = $region5
    $region4: #{tpu_custom_call.1} parent=1 // pred_region
      _
    $region5: #{tpu_custom_call.1} parent=1 // pred_fallthru
      _
    // Predicated region
    $region6: #{tpu_custom_call.1} parent=1 // pred_check
      _
    $region7: #{tpu_custom_call.1} parent=1 // pred_check_branch
      %11 = sbr.rel (0) target = $region9
    $region8: #{tpu_custom_call.1} parent=1 // pred_region
      %s13 = ssub.s32 4096, 4096
      %14 = vsyncadd [#allocation3], %s13
      %s15 = sshll.u32 [#allocation2], 4
      %s16 = int_to_ptr.vmem [resolvable:$true] %s15
      %21 = dma.hbm_to_vmem [thread:$0]  %s1, 4096, %s16, [#allocation3], 64, 64, 4
    $region9: #{tpu_custom_call.1} parent=1 // pred_fallthru
      _
    // Predicated region
    $region10: #{tpu_custom_call.1} parent=1 // pred_check
      _
    $region11: #{tpu_custom_call.1} parent=1 // pred_check_branch
      %23 = sbr.rel (0) target = $region13
    $region12: #{tpu_custom_call.1} parent=1 // pred_region
      %24 = dma.done [#allocation3], 4096
    $region13: #{tpu_custom_call.1} parent=1 // pred_fallthru
      _
    %v26 = vld [vmem:[%s0] sm:$0xff]
    %v27 = vld [vmem:[%s0 + $0x8] sm:$0xff]
    %v28 = vld [vmem:[%s0 + $0x10] sm:$0xff]
    %v29 = vld [vmem:[%s0 + $0x18] sm:$0xff]
    %v30 = vld [vmem:[%s0 + $0x20] sm:$0xff]
    %v31 = vld [vmem:[%s0 + $0x28] sm:$0xff]
    %v32 = vld [vmem:[%s0 + $0x30] sm:$0xff]
    %v33 = vld [vmem:[%s0 + $0x38] sm:$0xff]
    %v34 = vld [vmem:[%s0 + $0x40] sm:$0xff]
    %v35 = vld [vmem:[%s0 + $0x48] sm:$0xff]
    %v36 = vld [vmem:[%s0 + $0x50] sm:$0xff]
    %v37 = vld [vmem:[%s0 + $0x58] sm:$0xff]
    %v38 = vld [vmem:[%s0 + $0x60] sm:$0xff]
    %v39 = vld [vmem:[%s0 + $0x68] sm:$0xff]
    %v40 = vld [vmem:[%s0 + $0x70] sm:$0xff]
    %v41 = vld [vmem:[%s0 + $0x78] sm:$0xff]
    %v42 = vld [vmem:[%s0 + $0x80] sm:$0xff]
    %v43 = vld [vmem:[%s0 + $0x88] sm:$0xff]
    %v44 = vld [vmem:[%s0 + $0x90] sm:$0xff]
    %v45 = vld [vmem:[%s0 + $0x98] sm:$0xff]
    %v46 = vld [vmem:[%s0 + $0xa0] sm:$0xff]
    %v47 = vld [vmem:[%s0 + $0xa8] sm:$0xff]
    %v48 = vld [vmem:[%s0 + $0xb0] sm:$0xff]
    %v49 = vld [vmem:[%s0 + $0xb8] sm:$0xff]
    %v50 = vld [vmem:[%s0 + $0xc0] sm:$0xff]
    %v51 = vld [vmem:[%s0 + $0xc8] sm:$0xff]
    %v52 = vld [vmem:[%s0 + $0xd0] sm:$0xff]
    %v53 = vld [vmem:[%s0 + $0xd8] sm:$0xff]
    %v54 = vld [vmem:[%s0 + $0xe0] sm:$0xff]
    %v55 = vld [vmem:[%s0 + $0xe8] sm:$0xff]
    %v56 = vld [vmem:[%s0 + $0xf0] sm:$0xff]
    %v57 = vld [vmem:[%s0 + $0xf8] sm:$0xff]
    %v58 = vld [vmem:[%s0 + $0x100] sm:$0xff]
    %v59 = vld [vmem:[%s0 + $0x108] sm:$0xff]
    %v60 = vld [vmem:[%s0 + $0x110] sm:$0xff]
    %v61 = vld [vmem:[%s0 + $0x118] sm:$0xff]
    %v62 = vld [vmem:[%s0 + $0x120] sm:$0xff]
    %v63 = vld [vmem:[%s0 + $0x128] sm:$0xff]
    %v64 = vld [vmem:[%s0 + $0x130] sm:$0xff]
    %v65 = vld [vmem:[%s0 + $0x138] sm:$0xff]
    %v66 = vld [vmem:[%s0 + $0x140] sm:$0xff]
    %v67 = vld [vmem:[%s0 + $0x148] sm:$0xff]
    %v68 = vld [vmem:[%s0 + $0x150] sm:$0xff]
    %v69 = vld [vmem:[%s0 + $0x158] sm:$0xff]
    %v70 = vld [vmem:[%s0 + $0x160] sm:$0xff]
    %v71 = vld [vmem:[%s0 + $0x168] sm:$0xff]
    %v72 = vld [vmem:[%s0 + $0x170] sm:$0xff]
    %v73 = vld [vmem:[%s0 + $0x178] sm:$0xff]
    %v74 = vld [vmem:[%s0 + $0x180] sm:$0xff]
    %v75 = vld [vmem:[%s0 + $0x188] sm:$0xff]
    %v76 = vld [vmem:[%s0 + $0x190] sm:$0xff]
    %v77 = vld [vmem:[%s0 + $0x198] sm:$0xff]
    %v78 = vld [vmem:[%s0 + $0x1a0] sm:$0xff]
    %v79 = vld [vmem:[%s0 + $0x1a8] sm:$0xff]
    %v80 = vld [vmem:[%s0 + $0x1b0] sm:$0xff]
    %v81 = vld [vmem:[%s0 + $0x1b8] sm:$0xff]
    %v82 = vld [vmem:[%s0 + $0x1c0] sm:$0xff]
    %v83 = vld [vmem:[%s0 + $0x1c8] sm:$0xff]
    %v84 = vld [vmem:[%s0 + $0x1d0] sm:$0xff]
    %v85 = vld [vmem:[%s0 + $0x1d8] sm:$0xff]
    %v86 = vld [vmem:[%s0 + $0x1e0] sm:$0xff]
    %v87 = vld [vmem:[%s0 + $0x1e8] sm:$0xff]
    %v88 = vld [vmem:[%s0 + $0x1f0] sm:$0xff]
    %v89 = vld [vmem:[%s0 + $0x1f8] sm:$0xff]
    %v90 = vld [vmem:[%s0 + $0x200] sm:$0xff]
    %v91 = vld [vmem:[%s0 + $0x208] sm:$0xff]
    %v92 = vld [vmem:[%s0 + $0x210] sm:$0xff]
    %v93 = vld [vmem:[%s0 + $0x218] sm:$0xff]
    %v94 = vld [vmem:[%s0 + $0x220] sm:$0xff]
    %v95 = vld [vmem:[%s0 + $0x228] sm:$0xff]
    %v96 = vld [vmem:[%s0 + $0x230] sm:$0xff]
    %v97 = vld [vmem:[%s0 + $0x238] sm:$0xff]
    %v98 = vld [vmem:[%s0 + $0x240] sm:$0xff]
    %v99 = vld [vmem:[%s0 + $0x248] sm:$0xff]
    %v100 = vld [vmem:[%s0 + $0x250] sm:$0xff]
    %v101 = vld [vmem:[%s0 + $0x258] sm:$0xff]
    %v102 = vld [vmem:[%s0 + $0x260] sm:$0xff]
    %v103 = vld [vmem:[%s0 + $0x268] sm:$0xff]
    %v104 = vld [vmem:[%s0 + $0x270] sm:$0xff]
    %v105 = vld [vmem:[%s0 + $0x278] sm:$0xff]
    %v106 = vld [vmem:[%s0 + $0x280] sm:$0xff]
    %v107 = vld [vmem:[%s0 + $0x288] sm:$0xff]
    %v108 = vld [vmem:[%s0 + $0x290] sm:$0xff]
    %v109 = vld [vmem:[%s0 + $0x298] sm:$0xff]
    %v110 = vld [vmem:[%s0 + $0x2a0] sm:$0xff]
    %v111 = vld [vmem:[%s0 + $0x2a8] sm:$0xff]
    %v112 = vld [vmem:[%s0 + $0x2b0] sm:$0xff]
    %v113 = vld [vmem:[%s0 + $0x2b8] sm:$0xff]
    %v114 = vld [vmem:[%s0 + $0x2c0] sm:$0xff]
    %v115 = vld [vmem:[%s0 + $0x2c8] sm:$0xff]
    %v116 = vld [vmem:[%s0 + $0x2d0] sm:$0xff]
    %v117 = vld [vmem:[%s0 + $0x2d8] sm:$0xff]
    %v118 = vld [vmem:[%s0 + $0x2e0] sm:$0xff]
    %v119 = vld [vmem:[%s0 + $0x2e8] sm:$0xff]
    %v120 = vld [vmem:[%s0 + $0x2f0] sm:$0xff]
    %v121 = vld [vmem:[%s0 + $0x2f8] sm:$0xff]
    %v122 = vld [vmem:[%s0 + $0x300] sm:$0xff]
    %v123 = vld [vmem:[%s0 + $0x308] sm:$0xff]
    %v124 = vld [vmem:[%s0 + $0x310] sm:$0xff]
    %v125 = vld [vmem:[%s0 + $0x318] sm:$0xff]
    %v126 = vld [vmem:[%s0 + $0x320] sm:$0xff]
    %v127 = vld [vmem:[%s0 + $0x328] sm:$0xff]
    %v128 = vld [vmem:[%s0 + $0x330] sm:$0xff]
    %v129 = vld [vmem:[%s0 + $0x338] sm:$0xff]
    %v130 = vld [vmem:[%s0 + $0x340] sm:$0xff]
    %v131 = vld [vmem:[%s0 + $0x348] sm:$0xff]
    %v132 = vld [vmem:[%s0 + $0x350] sm:$0xff]
    %v133 = vld [vmem:[%s0 + $0x358] sm:$0xff]
    %v134 = vld [vmem:[%s0 + $0x360] sm:$0xff]
    %v135 = vld [vmem:[%s0 + $0x368] sm:$0xff]
    %v136 = vld [vmem:[%s0 + $0x370] sm:$0xff]
    %v137 = vld [vmem:[%s0 + $0x378] sm:$0xff]
    %v138 = vpack.c.bf16 %v33, %v26
    %v139 = vpack.c.bf16 %v34, %v27
    %v140 = vpack.c.bf16 %v35, %v28
    %v141 = vpack.c.bf16 %v36, %v29
    %v142 = vpack.c.bf16 %v37, %v30
    %v143 = vpack.c.bf16 %v38, %v31
    %v144 = vpack.c.bf16 %v39, %v32
    %v145 = vpack.c.bf16 %v47, %v40
    %v146 = vpack.c.bf16 %v48, %v41
    %v147 = vpack.c.bf16 %v49, %v42
    %v148 = vpack.c.bf16 %v50, %v43
    %v149 = vpack.c.bf16 %v51, %v44
    %v150 = vpack.c.bf16 %v52, %v45
    %v151 = vpack.c.bf16 %v53, %v46
    %v152 = vpack.c.bf16 %v61, %v54
    %v153 = vpack.c.bf16 %v62, %v55
    %v154 = vpack.c.bf16 %v63, %v56
    %v155 = vpack.c.bf16 %v64, %v57
    %v156 = vpack.c.bf16 %v65, %v58
    %v157 = vpack.c.bf16 %v66, %v59
    %v158 = vpack.c.bf16 %v67, %v60
    %v159 = vpack.c.bf16 %v75, %v68
    %v160 = vpack.c.bf16 %v76, %v69
    %v161 = vpack.c.bf16 %v77, %v70
    %v162 = vpack.c.bf16 %v78, %v71
    %v163 = vpack.c.bf16 %v79, %v72
    %v164 = vpack.c.bf16 %v80, %v73
    %v165 = vpack.c.bf16 %v81, %v74
    %v166 = vpack.c.bf16 %v89, %v82
    %v167 = vpack.c.bf16 %v90, %v83
    %v168 = vpack.c.bf16 %v91, %v84
    %v169 = vpack.c.bf16 %v92, %v85
    %v170 = vpack.c.bf16 %v93, %v86
    %v171 = vpack.c.bf16 %v94, %v87
    %v172 = vpack.c.bf16 %v95, %v88
    %v173 = vpack.c.bf16 %v103, %v96
    %v174 = vpack.c.bf16 %v104, %v97
    %v175 = vpack.c.bf16 %v105, %v98
    %v176 = vpack.c.bf16 %v106, %v99
    %v177 = vpack.c.bf16 %v107, %v100
    %v178 = vpack.c.bf16 %v108, %v101
    %v179 = vpack.c.bf16 %v109, %v102
    %v180 = vpack.c.bf16 %v117, %v110
    %v181 = vpack.c.bf16 %v118, %v111
    %v182 = vpack.c.bf16 %v119, %v112
    %v183 = vpack.c.bf16 %v120, %v113
    %v184 = vpack.c.bf16 %v121, %v114
    %v185 = vpack.c.bf16 %v122, %v115
    %v186 = vpack.c.bf16 %v123, %v116
    %v187 = vpack.c.bf16 %v131, %v124
    %v188 = vpack.c.bf16 %v132, %v125
    %v189 = vpack.c.bf16 %v133, %v126
    %v190 = vpack.c.bf16 %v134, %v127
    %v191 = vpack.c.bf16 %v135, %v128
    %v192 = vpack.c.bf16 %v136, %v129
    %v193 = vpack.c.bf16 %v137, %v130
    %v194 = vld [vmem:[#allocation2] sm:$0xf]
    %v195 = vld [vmem:[#allocation2 + $0x4] sm:$0xf]
    %v196 = vld [vmem:[#allocation2 + $0x8] sm:$0xf]
    %v197 = vld [vmem:[#allocation2 + $0xc] sm:$0xf]
    %v198 = vld [vmem:[#allocation2 + $0x10] sm:$0xf]
    %v199 = vld [vmem:[#allocation2 + $0x14] sm:$0xf]
    %v200 = vld [vmem:[#allocation2 + $0x18] sm:$0xf]
    %v201 = vld [vmem:[#allocation2 + $0x1c] sm:$0xf]
    %v202 = vld [vmem:[#allocation2 + $0x20] sm:$0xf]
    %v203 = vld [vmem:[#allocation2 + $0x24] sm:$0xf]
    %v204 = vld [vmem:[#allocation2 + $0x28] sm:$0xf]
    %v205 = vld [vmem:[#allocation2 + $0x2c] sm:$0xf]
    %v206 = vld [vmem:[#allocation2 + $0x30] sm:$0xf]
    %v207 = vld [vmem:[#allocation2 + $0x34] sm:$0xf]
    %v208 = vld [vmem:[#allocation2 + $0x38] sm:$0xf]
    %v209 = vld [vmem:[#allocation2 + $0x3c] sm:$0xf]
    %v210 = vld [vmem:[#allocation2 + $0x40] sm:$0xf]
    %v211 = vld [vmem:[#allocation2 + $0x44] sm:$0xf]
    %v212 = vld [vmem:[#allocation2 + $0x48] sm:$0xf]
    %v213 = vld [vmem:[#allocation2 + $0x4c] sm:$0xf]
    %v214 = vld [vmem:[#allocation2 + $0x50] sm:$0xf]
    %v215 = vld [vmem:[#allocation2 + $0x54] sm:$0xf]
    %v216 = vld [vmem:[#allocation2 + $0x58] sm:$0xf]
    %v217 = vld [vmem:[#allocation2 + $0x5c] sm:$0xf]
    %v218 = vld [vmem:[#allocation2 + $0x60] sm:$0xf]
    %v219 = vld [vmem:[#allocation2 + $0x64] sm:$0xf]
    %v220 = vld [vmem:[#allocation2 + $0x68] sm:$0xf]
    %v221 = vld [vmem:[#allocation2 + $0x6c] sm:$0xf]
    %v222 = vld [vmem:[#allocation2 + $0x70] sm:$0xf]
    %v223 = vld [vmem:[#allocation2 + $0x74] sm:$0xf]
    %v224 = vld [vmem:[#allocation2 + $0x78] sm:$0xf]
    %v225 = vld [vmem:[#allocation2 + $0x7c] sm:$0xf]
    %v226 = vld [vmem:[#allocation2 + $0x80] sm:$0xf]
    %v227 = vld [vmem:[#allocation2 + $0x84] sm:$0xf]
    %v228 = vld [vmem:[#allocation2 + $0x88] sm:$0xf]
    %v229 = vld [vmem:[#allocation2 + $0x8c] sm:$0xf]
    %v230 = vld [vmem:[#allocation2 + $0x90] sm:$0xf]
    %v231 = vld [vmem:[#allocation2 + $0x94] sm:$0xf]
    %v232 = vld [vmem:[#allocation2 + $0x98] sm:$0xf]
    %v233 = vld [vmem:[#allocation2 + $0x9c] sm:$0xf]
    %v234 = vld [vmem:[#allocation2 + $0xa0] sm:$0xf]
    %v235 = vld [vmem:[#allocation2 + $0xa4] sm:$0xf]
    %v236 = vld [vmem:[#allocation2 + $0xa8] sm:$0xf]
    %v237 = vld [vmem:[#allocation2 + $0xac] sm:$0xf]
    %v238 = vld [vmem:[#allocation2 + $0xb0] sm:$0xf]
    %v239 = vld [vmem:[#allocation2 + $0xb4] sm:$0xf]
    %v240 = vld [vmem:[#allocation2 + $0xb8] sm:$0xf]
    %v241 = vld [vmem:[#allocation2 + $0xbc] sm:$0xf]
    %v242 = vld [vmem:[#allocation2 + $0xc0] sm:$0xf]
    %v243 = vld [vmem:[#allocation2 + $0xc4] sm:$0xf]
    %v244 = vld [vmem:[#allocation2 + $0xc8] sm:$0xf]
    %v245 = vld [vmem:[#allocation2 + $0xcc] sm:$0xf]
    %v246 = vld [vmem:[#allocation2 + $0xd0] sm:$0xf]
    %v247 = vld [vmem:[#allocation2 + $0xd4] sm:$0xf]
    %v248 = vld [vmem:[#allocation2 + $0xd8] sm:$0xf]
    %v249 = vld [vmem:[#allocation2 + $0xdc] sm:$0xf]
    %v250 = vld [vmem:[#allocation2 + $0xe0] sm:$0xf]
    %v251 = vld [vmem:[#allocation2 + $0xe4] sm:$0xf]
    %v252 = vld [vmem:[#allocation2 + $0xe8] sm:$0xf]
    %v253 = vld [vmem:[#allocation2 + $0xec] sm:$0xf]
    %v254 = vld [vmem:[#allocation2 + $0xf0] sm:$0xf]
    %v255 = vld [vmem:[#allocation2 + $0xf4] sm:$0xf]
    %v256 = vld [vmem:[#allocation2 + $0xf8] sm:$0xf]
    %v257 = vld [vmem:[#allocation2 + $0xfc] sm:$0xf]
    %v322 = vunpack.c.l.b16 %v194
    %v323 = vunpack.c.l.b16 %v195
    %v324 = vunpack.c.l.b16 %v196
    %v325 = vunpack.c.l.b16 %v197
    %v326 = vunpack.c.l.b16 %v198
    %v327 = vunpack.c.l.b16 %v199
    %v328 = vunpack.c.l.b16 %v200
    %v329 = vunpack.c.l.b16 %v201
    %v330 = vunpack.c.l.b16 %v202
    %v331 = vunpack.c.l.b16 %v203
    %v332 = vunpack.c.l.b16 %v204
    %v333 = vunpack.c.l.b16 %v205
    %v334 = vunpack.c.l.b16 %v206
    %v335 = vunpack.c.l.b16 %v207
    %v336 = vunpack.c.l.b16 %v208
    %v337 = vunpack.c.l.b16 %v209
    %v338 = vunpack.c.l.b16 %v210
    %v339 = vunpack.c.l.b16 %v211
    %v340 = vunpack.c.l.b16 %v212
    %v341 = vunpack.c.l.b16 %v213
    %v342 = vunpack.c.l.b16 %v214
    %v343 = vunpack.c.l.b16 %v215
    %v344 = vunpack.c.l.b16 %v216
    %v345 = vunpack.c.l.b16 %v217
    %v346 = vunpack.c.l.b16 %v218
    %v347 = vunpack.c.l.b16 %v219
    %v348 = vunpack.c.l.b16 %v220
    %v349 = vunpack.c.l.b16 %v221
    %v350 = vunpack.c.l.b16 %v222
    %v351 = vunpack.c.l.b16 %v223
    %v352 = vunpack.c.l.b16 %v224
    %v353 = vunpack.c.l.b16 %v225
    %v354 = vunpack.c.l.b16 %v226
    %v355 = vunpack.c.l.b16 %v227
    %v356 = vunpack.c.l.b16 %v228
    %v357 = vunpack.c.l.b16 %v229
    %v358 = vunpack.c.l.b16 %v230
    %v359 = vunpack.c.l.b16 %v231
    %v360 = vunpack.c.l.b16 %v232
    %v361 = vunpack.c.l.b16 %v233
    %v362 = vunpack.c.l.b16 %v234
    %v363 = vunpack.c.l.b16 %v235
    %v364 = vunpack.c.l.b16 %v236
    %v365 = vunpack.c.l.b16 %v237
    %v366 = vunpack.c.l.b16 %v238
    %v367 = vunpack.c.l.b16 %v239
    %v368 = vunpack.c.l.b16 %v240
    %v369 = vunpack.c.l.b16 %v241
    %v370 = vunpack.c.l.b16 %v242
    %v371 = vunpack.c.l.b16 %v243
    %v372 = vunpack.c.l.b16 %v244
    %v373 = vunpack.c.l.b16 %v245
    %v374 = vunpack.c.l.b16 %v246
    %v375 = vunpack.c.l.b16 %v247
    %v376 = vunpack.c.l.b16 %v248
    %v377 = vunpack.c.l.b16 %v249
    %v378 = vunpack.c.l.b16 %v250
    %v379 = vunpack.c.l.b16 %v251
    %v380 = vunpack.c.l.b16 %v252
    %v381 = vunpack.c.l.b16 %v253
    %v382 = vunpack.c.l.b16 %v254
    %v383 = vunpack.c.l.b16 %v255
    %v384 = vunpack.c.l.b16 %v256
    %v385 = vunpack.c.l.b16 %v257
    %v386 = vpack.c.b16 %v323, %v322
    %v387 = vpack.c.b16 %v325, %v324
    %v388 = vpack.c.b16 %v327, %v326
    %v389 = vpack.c.b16 %v329, %v328
    %v390 = vpack.c.b16 %v331, %v330
    %v391 = vpack.c.b16 %v333, %v332
    %v392 = vpack.c.b16 %v335, %v334
    %v393 = vpack.c.b16 %v337, %v336
    %v394 = vpack.c.b16 %v339, %v338
    %v395 = vpack.c.b16 %v341, %v340
    %v396 = vpack.c.b16 %v343, %v342
    %v397 = vpack.c.b16 %v345, %v344
    %v398 = vpack.c.b16 %v347, %v346
    %v399 = vpack.c.b16 %v349, %v348
    %v400 = vpack.c.b16 %v351, %v350
    %v401 = vpack.c.b16 %v353, %v352
    %v402 = vpack.c.b16 %v355, %v354
    %v403 = vpack.c.b16 %v357, %v356
    %v404 = vpack.c.b16 %v359, %v358
    %v405 = vpack.c.b16 %v361, %v360
    %v406 = vpack.c.b16 %v363, %v362
    %v407 = vpack.c.b16 %v365, %v364
    %v408 = vpack.c.b16 %v367, %v366
    %v409 = vpack.c.b16 %v369, %v368
    %v410 = vpack.c.b16 %v371, %v370
    %v411 = vpack.c.b16 %v373, %v372
    %v412 = vpack.c.b16 %v375, %v374
    %v413 = vpack.c.b16 %v377, %v376
    %v414 = vpack.c.b16 %v379, %v378
    %v415 = vpack.c.b16 %v381, %v380
    %v416 = vpack.c.b16 %v383, %v382
    %v417 = vpack.c.b16 %v385, %v384
    %450 = vmatprep.subr.bf16.mxu0 %v139
    %451 = vmatpush1.bf16.msra.mxu0 %v138
    %452 = vmatprep.subr.bf16.mxu0 %v146
    %453 = vmatpush1.bf16.msra.mxu0 %v145
    %454 = vmatprep.subr.bf16.mxu0 %v153
    %455 = vmatpush1.bf16.msra.mxu0 %v152
    %456 = vmatprep.subr.bf16.mxu0 %v160
    %457 = vmatpush1.bf16.msra.mxu0 %v159
    %458 = vmatprep.subr.bf16.mxu0 %v167
    %459 = vmatpush1.bf16.msra.mxu0 %v166
    %460 = vmatprep.subr.bf16.mxu0 %v174
    %461 = vmatpush1.bf16.msra.mxu0 %v173
    %462 = vmatprep.subr.bf16.mxu0 %v181
    %463 = vmatpush1.bf16.msra.mxu0 %v180
    %464 = vmatprep.subr.bf16.mxu0 %v188
    %465 = vmatpush1.bf16.msra.mxu0 %v187
    %466 = vmatprep.subr.bf16.mxu0 0
    %467 = vmatpush1.bf16.msra.mxu0 0
    %468 = vmatprep.subr.bf16.mxu0 0
    %469 = vmatpush1.bf16.msra.mxu0 0
    %470 = vmatprep.subr.bf16.mxu0 0
    %471 = vmatpush1.bf16.msra.mxu0 0
    %472 = vmatprep.subr.bf16.mxu0 0
    %473 = vmatpush1.bf16.msra.mxu0 0
    %474 = vmatprep.subr.bf16.mxu0 0
    %475 = vmatpush1.bf16.msra.mxu0 0
    %476 = vmatprep.subr.bf16.mxu0 0
    %477 = vmatpush1.bf16.msra.mxu0 0
    %478 = vmatprep.subr.bf16.mxu0 0
    %479 = vmatpush1.bf16.msra.mxu0 0
    %480 = vmatprep.subr.bf16.mxu0 0
    %481 = vmatpush1.bf16.msra.mxu0 0
    %482 = vmatprep.mubr.bf16.mxu0 0
    %483 = vmatmul.mubr.bf16.gmra.mrb[0].mxu0 %v386
    %v484 = vpop.f32.mrb[0].mxu0
    %v485 = vadd.f32 0.0, %v484
    %v486 = vpop.f32.mrb[0].mxu0
    %v487 = vadd.f32 0.0, %v486
    %v488 = vpop.f32.mrb[0].mxu0
    %v489 = vadd.f32 0.0, %v488
    %v490 = vpop.f32.mrb[0].mxu0
    %v491 = vadd.f32 0.0, %v490
    %492 = vmatprep.mubr.bf16.mxu0 0
    %493 = vmatmul.mubr.bf16.gmra.mrb[0].mxu0 %v387
    %v494 = vpop.f32.mrb[0].mxu0
    %v495 = vadd.f32 0.0, %v494
    %v496 = vpop.f32.mrb[0].mxu0
    %v497 = vadd.f32 0.0, %v496
    %v498 = vpop.f32.mrb[0].mxu0
    %v499 = vadd.f32 0.0, %v498
    %v500 = vpop.f32.mrb[0].mxu0
    %v501 = vadd.f32 0.0, %v500
    %502 = vmatprep.mubr.bf16.mxu0 0
    %503 = vmatmul.mubr.bf16.gmra.mrb[0].mxu0 %v388
    %v504 = vpop.f32.mrb[0].mxu0
    %v505 = vadd.f32 0.0, %v504
    %v506 = vpop.f32.mrb[0].mxu0
    %v507 = vadd.f32 0.0, %v506
    %v508 = vpop.f32.mrb[0].mxu0
    %v509 = vadd.f32 0.0, %v508
    %v510 = vpop.f32.mrb[0].mxu0
    %v511 = vadd.f32 0.0, %v510
    %512 = vmatprep.mubr.bf16.mxu0 0
    %513 = vmatmul.mubr.bf16.gmra.mrb[0].mxu0 %v389
    %v514 = vpop.f32.mrb[0].mxu0
    %v515 = vadd.f32 0.0, %v514
    %v516 = vpop.f32.mrb[0].mxu0
    %v517 = vadd.f32 0.0, %v516
    %v518 = vpop.f32.mrb[0].mxu0
    %v519 = vadd.f32 0.0, %v518
    %v520 = vpop.f32.mrb[0].mxu0
    %v521 = vadd.f32 0.0, %v520
    %522 = vmatprep.mubr.bf16.mxu0 0
    %523 = vmatmul.mubr.bf16.gmra.mrb[0].mxu0 %v390
    %v524 = vpop.f32.mrb[0].mxu0
    %v525 = vadd.f32 0.0, %v524
    %v526 = vpop.f32.mrb[0].mxu0
    %v527 = vadd.f32 0.0, %v526
    %v528 = vpop.f32.mrb[0].mxu0
    %v529 = vadd.f32 0.0, %v528
    %v530 = vpop.f32.mrb[0].mxu0
    %v531 = vadd.f32 0.0, %v530
    %532 = vmatprep.mubr.bf16.mxu0 0
    %533 = vmatmul.mubr.bf16.gmra.mrb[0].mxu0 %v391
    %v534 = vpop.f32.mrb[0].mxu0
    %v535 = vadd.f32 0.0, %v534
    %v536 = vpop.f32.mrb[0].mxu0
    %v537 = vadd.f32 0.0, %v536
    %v538 = vpop.f32.mrb[0].mxu0
    %v539 = vadd.f32 0.0, %v538
    %v540 = vpop.f32.mrb[0].mxu0
    %v541 = vadd.f32 0.0, %v540
    %542 = vmatprep.mubr.bf16.mxu0 0
    %543 = vmatmul.mubr.bf16.gmra.mrb[0].mxu0 %v392
    %v544 = vpop.f32.mrb[0].mxu0
    %v545 = vadd.f32 0.0, %v544
    %v546 = vpop.f32.mrb[0].mxu0
    %v547 = vadd.f32 0.0, %v546
    %v548 = vpop.f32.mrb[0].mxu0
    %v549 = vadd.f32 0.0, %v548
    %v550 = vpop.f32.mrb[0].mxu0
    %v551 = vadd.f32 0.0, %v550
    %552 = vmatprep.mubr.bf16.mxu0 0
    %553 = vmatmul.mubr.bf16.gmra.mrb[0].mxu0 %v393
    %v554 = vpop.f32.mrb[0].mxu0
    %v555 = vadd.f32 0.0, %v554
    %v556 = vpop.f32.mrb[0].mxu0
    %v557 = vadd.f32 0.0, %v556
    %v558 = vpop.f32.mrb[0].mxu0
    %v559 = vadd.f32 0.0, %v558
    %v560 = vpop.f32.mrb[0].mxu0
    %v561 = vadd.f32 0.0, %v560
    %562 = vmatprep.mubr.bf16.mxu0 0
    %563 = vmatmul.mubr.bf16.gmra.mrb[0].mxu0 %v394
    %v564 = vpop.f32.mrb[0].mxu0
    %v565 = vadd.f32 0.0, %v564
    %v566 = vpop.f32.mrb[0].mxu0
    %v567 = vadd.f32 0.0, %v566
    %v568 = vpop.f32.mrb[0].mxu0
    %v569 = vadd.f32 0.0, %v568
    %v570 = vpop.f32.mrb[0].mxu0
    %v571 = vadd.f32 0.0, %v570
    %572 = vmatprep.mubr.bf16.mxu0 0
    %573 = vmatmul.mubr.bf16.gmra.mrb[0].mxu0 %v395
    %v574 = vpop.f32.mrb[0].mxu0
    %v575 = vadd.f32 0.0, %v574
    %v576 = vpop.f32.mrb[0].mxu0
    %v577 = vadd.f32 0.0, %v576
    %v578 = vpop.f32.mrb[0].mxu0
    %v579 = vadd.f32 0.0, %v578
    %v580 = vpop.f32.mrb[0].mxu0
    %v581 = vadd.f32 0.0, %v580
    %582 = vmatprep.mubr.bf16.mxu0 0
    %583 = vmatmul.mubr.bf16.gmra.mrb[0].mxu0 %v396
    %v584 = vpop.f32.mrb[0].mxu0
    %v585 = vadd.f32 0.0, %v584
    %v586 = vpop.f32.mrb[0].mxu0
    %v587 = vadd.f32 0.0, %v586
    %v588 = vpop.f32.mrb[0].mxu0
    %v589 = vadd.f32 0.0, %v588
    %v590 = vpop.f32.mrb[0].mxu0
    %v591 = vadd.f32 0.0, %v590
    %592 = vmatprep.mubr.bf16.mxu0 0
    %593 = vmatmul.mubr.bf16.gmra.mrb[0].mxu0 %v397
    %v594 = vpop.f32.mrb[0].mxu0
    %v595 = vadd.f32 0.0, %v594
    %v596 = vpop.f32.mrb[0].mxu0
    %v597 = vadd.f32 0.0, %v596
    %v598 = vpop.f32.mrb[0].mxu0
    %v599 = vadd.f32 0.0, %v598
    %v600 = vpop.f32.mrb[0].mxu0
    %v601 = vadd.f32 0.0, %v600
    %602 = vmatprep.mubr.bf16.mxu0 0
    %603 = vmatmul.mubr.bf16.gmra.mrb[0].mxu0 %v398
    %v604 = vpop.f32.mrb[0].mxu0
    %v605 = vadd.f32 0.0, %v604
    %v606 = vpop.f32.mrb[0].mxu0
    %v607 = vadd.f32 0.0, %v606
    %v608 = vpop.f32.mrb[0].mxu0
    %v609 = vadd.f32 0.0, %v608
    %v610 = vpop.f32.mrb[0].mxu0
    %v611 = vadd.f32 0.0, %v610
    %612 = vmatprep.mubr.bf16.mxu0 0
    %613 = vmatmul.mubr.bf16.gmra.mrb[0].mxu0 %v399
    %v614 = vpop.f32.mrb[0].mxu0
    %v615 = vadd.f32 0.0, %v614
    %v616 = vpop.f32.mrb[0].mxu0
    %v617 = vadd.f32 0.0, %v616
    %v618 = vpop.f32.mrb[0].mxu0
    %v619 = vadd.f32 0.0, %v618
    %v620 = vpop.f32.mrb[0].mxu0
    %v621 = vadd.f32 0.0, %v620
    %622 = vmatprep.mubr.bf16.mxu0 0
    %623 = vmatmul.mubr.bf16.gmra.mrb[0].mxu0 %v400
    %v624 = vpop.f32.mrb[0].mxu0
    %v625 = vadd.f32 0.0, %v624
    %v626 = vpop.f32.mrb[0].mxu0
    %v627 = vadd.f32 0.0, %v626
    %v628 = vpop.f32.mrb[0].mxu0
    %v629 = vadd.f32 0.0, %v628
    %v630 = vpop.f32.mrb[0].mxu0
    %v631 = vadd.f32 0.0, %v630
    %632 = vmatprep.mubr.bf16.mxu0 0
    %633 = vmatmul.mubr.bf16.gmra.mrb[0].mxu0 %v401
    %v634 = vpop.f32.mrb[0].mxu0
    %v635 = vadd.f32 0.0, %v634
    %v636 = vpop.f32.mrb[0].mxu0
    %v637 = vadd.f32 0.0, %v636
    %v638 = vpop.f32.mrb[0].mxu0
    %v639 = vadd.f32 0.0, %v638
    %v640 = vpop.f32.mrb[0].mxu0
    %v641 = vadd.f32 0.0, %v640
    %642 = vmatprep.mubr.bf16.mxu0 0
    %643 = vmatmul.mubr.bf16.gmra.mrb[0].mxu0 %v402
    %v644 = vpop.f32.mrb[0].mxu0
    %v645 = vadd.f32 0.0, %v644
    %v646 = vpop.f32.mrb[0].mxu0
    %v647 = vadd.f32 0.0, %v646
    %v648 = vpop.f32.mrb[0].mxu0
    %v649 = vadd.f32 0.0, %v648
    %v650 = vpop.f32.mrb[0].mxu0
    %v651 = vadd.f32 0.0, %v650
    %652 = vmatprep.mubr.bf16.mxu0 0
    %653 = vmatmul.mubr.bf16.gmra.mrb[0].mxu0 %v403
    %v654 = vpop.f32.mrb[0].mxu0
    %v655 = vadd.f32 0.0, %v654
    %v656 = vpop.f32.mrb[0].mxu0
    %v657 = vadd.f32 0.0, %v656
    %v658 = vpop.f32.mrb[0].mxu0
    %v659 = vadd.f32 0.0, %v658
    %v660 = vpop.f32.mrb[0].mxu0
    %v661 = vadd.f32 0.0, %v660
    %662 = vmatprep.mubr.bf16.mxu0 0
    %663 = vmatmul.mubr.bf16.gmra.mrb[0].mxu0 %v404
    %v664 = vpop.f32.mrb[0].mxu0
    %v665 = vadd.f32 0.0, %v664
    %v666 = vpop.f32.mrb[0].mxu0
    %v667 = vadd.f32 0.0, %v666
    %v668 = vpop.f32.mrb[0].mxu0
    %v669 = vadd.f32 0.0, %v668
    %v670 = vpop.f32.mrb[0].mxu0
    %v671 = vadd.f32 0.0, %v670
    %672 = vmatprep.mubr.bf16.mxu0 0
    %673 = vmatmul.mubr.bf16.gmra.mrb[0].mxu0 %v405
    %v674 = vpop.f32.mrb[0].mxu0
    %v675 = vadd.f32 0.0, %v674
    %v676 = vpop.f32.mrb[0].mxu0
    %v677 = vadd.f32 0.0, %v676
    %v678 = vpop.f32.mrb[0].mxu0
    %v679 = vadd.f32 0.0, %v678
    %v680 = vpop.f32.mrb[0].mxu0
    %v681 = vadd.f32 0.0, %v680
    %682 = vmatprep.mubr.bf16.mxu0 0
    %683 = vmatmul.mubr.bf16.gmra.mrb[0].mxu0 %v406
    %v684 = vpop.f32.mrb[0].mxu0
    %v685 = vadd.f32 0.0, %v684
    %v686 = vpop.f32.mrb[0].mxu0
    %v687 = vadd.f32 0.0, %v686
    %v688 = vpop.f32.mrb[0].mxu0
    %v689 = vadd.f32 0.0, %v688
    %v690 = vpop.f32.mrb[0].mxu0
    %v691 = vadd.f32 0.0, %v690
    %692 = vmatprep.mubr.bf16.mxu0 0
    %693 = vmatmul.mubr.bf16.gmra.mrb[0].mxu0 %v407
    %v694 = vpop.f32.mrb[0].mxu0
    %v695 = vadd.f32 0.0, %v694
    %v696 = vpop.f32.mrb[0].mxu0
    %v697 = vadd.f32 0.0, %v696
    %v698 = vpop.f32.mrb[0].mxu0
    %v699 = vadd.f32 0.0, %v698
    %v700 = vpop.f32.mrb[0].mxu0
    %v701 = vadd.f32 0.0, %v700
    %702 = vmatprep.mubr.bf16.mxu0 0
    %703 = vmatmul.mubr.bf16.gmra.mrb[0].mxu0 %v408
    %v704 = vpop.f32.mrb[0].mxu0
    %v705 = vadd.f32 0.0, %v704
    %v706 = vpop.f32.mrb[0].mxu0
    %v707 = vadd.f32 0.0, %v706
    %v708 = vpop.f32.mrb[0].mxu0
    %v709 = vadd.f32 0.0, %v708
    %v710 = vpop.f32.mrb[0].mxu0
    %v711 = vadd.f32 0.0, %v710
    %712 = vmatprep.mubr.bf16.mxu0 0
    %713 = vmatmul.mubr.bf16.gmra.mrb[0].mxu0 %v409
    %v714 = vpop.f32.mrb[0].mxu0
    %v715 = vadd.f32 0.0, %v714
    %v716 = vpop.f32.mrb[0].mxu0
    %v717 = vadd.f32 0.0, %v716
    %v718 = vpop.f32.mrb[0].mxu0
    %v719 = vadd.f32 0.0, %v718
    %v720 = vpop.f32.mrb[0].mxu0
    %v721 = vadd.f32 0.0, %v720
    %722 = vmatprep.mubr.bf16.mxu0 0
    %723 = vmatmul.mubr.bf16.gmra.mrb[0].mxu0 %v410
    %v724 = vpop.f32.mrb[0].mxu0
    %v725 = vadd.f32 0.0, %v724
    %v726 = vpop.f32.mrb[0].mxu0
    %v727 = vadd.f32 0.0, %v726
    %v728 = vpop.f32.mrb[0].mxu0
    %v729 = vadd.f32 0.0, %v728
    %v730 = vpop.f32.mrb[0].mxu0
    %v731 = vadd.f32 0.0, %v730
    %732 = vmatprep.mubr.bf16.mxu0 0
    %733 = vmatmul.mubr.bf16.gmra.mrb[0].mxu0 %v411
    %v734 = vpop.f32.mrb[0].mxu0
    %v735 = vadd.f32 0.0, %v734
    %v736 = vpop.f32.mrb[0].mxu0
    %v737 = vadd.f32 0.0, %v736
    %v738 = vpop.f32.mrb[0].mxu0
    %v739 = vadd.f32 0.0, %v738
    %v740 = vpop.f32.mrb[0].mxu0
    %v741 = vadd.f32 0.0, %v740
    %742 = vmatprep.mubr.bf16.mxu0 0
    %743 = vmatmul.mubr.bf16.gmra.mrb[0].mxu0 %v412
    %v744 = vpop.f32.mrb[0].mxu0
    %v745 = vadd.f32 0.0, %v744
    %v746 = vpop.f32.mrb[0].mxu0
    %v747 = vadd.f32 0.0, %v746
    %v748 = vpop.f32.mrb[0].mxu0
    %v749 = vadd.f32 0.0, %v748
    %v750 = vpop.f32.mrb[0].mxu0
    %v751 = vadd.f32 0.0, %v750
    %752 = vmatprep.mubr.bf16.mxu0 0
    %753 = vmatmul.mubr.bf16.gmra.mrb[0].mxu0 %v413
    %v754 = vpop.f32.mrb[0].mxu0
    %v755 = vadd.f32 0.0, %v754
    %v756 = vpop.f32.mrb[0].mxu0
    %v757 = vadd.f32 0.0, %v756
    %v758 = vpop.f32.mrb[0].mxu0
    %v759 = vadd.f32 0.0, %v758
    %v760 = vpop.f32.mrb[0].mxu0
    %v761 = vadd.f32 0.0, %v760
    %762 = vmatprep.mubr.bf16.mxu0 0
    %763 = vmatmul.mubr.bf16.gmra.mrb[0].mxu0 %v414
    %v764 = vpop.f32.mrb[0].mxu0
    %v765 = vadd.f32 0.0, %v764
    %v766 = vpop.f32.mrb[0].mxu0
    %v767 = vadd.f32 0.0, %v766
    %v768 = vpop.f32.mrb[0].mxu0
    %v769 = vadd.f32 0.0, %v768
    %v770 = vpop.f32.mrb[0].mxu0
    %v771 = vadd.f32 0.0, %v770
    %772 = vmatprep.mubr.bf16.mxu0 0
    %773 = vmatmul.mubr.bf16.gmra.mrb[0].mxu0 %v415
    %v774 = vpop.f32.mrb[0].mxu0
    %v775 = vadd.f32 0.0, %v774
    %v776 = vpop.f32.mrb[0].mxu0
    %v777 = vadd.f32 0.0, %v776
    %v778 = vpop.f32.mrb[0].mxu0
    %v779 = vadd.f32 0.0, %v778
    %v780 = vpop.f32.mrb[0].mxu0
    %v781 = vadd.f32 0.0, %v780
    %782 = vmatprep.mubr.bf16.mxu0 0
    %783 = vmatmul.mubr.bf16.gmra.mrb[0].mxu0 %v416
    %v784 = vpop.f32.mrb[0].mxu0
    %v785 = vadd.f32 0.0, %v784
    %v786 = vpop.f32.mrb[0].mxu0
    %v787 = vadd.f32 0.0, %v786
    %v788 = vpop.f32.mrb[0].mxu0
    %v789 = vadd.f32 0.0, %v788
    %v790 = vpop.f32.mrb[0].mxu0
    %v791 = vadd.f32 0.0, %v790
    %792 = vmatprep.mubr.bf16.mxu0 0
    %793 = vmatmul.mubr.bf16.gmra.mrb[0].mxu0 %v417
    %v794 = vpop.f32.mrb[0].mxu0
    %v795 = vadd.f32 0.0, %v794
    %v796 = vpop.f32.mrb[0].mxu0
    %v797 = vadd.f32 0.0, %v796
    %v798 = vpop.f32.mrb[0].mxu0
    %v799 = vadd.f32 0.0, %v798
    %v800 = vpop.f32.mrb[0].mxu0
    %v801 = vadd.f32 0.0, %v800
    %802 = vdwg.mxu0
    %803 = vmatprep.subr.bf16.mxu0 %v141
    %804 = vmatpush1.bf16.msra.mxu0 %v140
    %805 = vmatprep.subr.bf16.mxu0 %v148
    %806 = vmatpush1.bf16.msra.mxu0 %v147
    %807 = vmatprep.subr.bf16.mxu0 %v155
    %808 = vmatpush1.bf16.msra.mxu0 %v154
    %809 = vmatprep.subr.bf16.mxu0 %v162
    %810 = vmatpush1.bf16.msra.mxu0 %v161
    %811 = vmatprep.subr.bf16.mxu0 %v169
    %812 = vmatpush1.bf16.msra.mxu0 %v168
    %813 = vmatprep.subr.bf16.mxu0 %v176
    %814 = vmatpush1.bf16.msra.mxu0 %v175
    %815 = vmatprep.subr.bf16.mxu0 %v183
    %816 = vmatpush1.bf16.msra.mxu0 %v182
    %817 = vmatprep.subr.bf16.mxu0 %v190
    %818 = vmatpush1.bf16.msra.mxu0 %v189
    %819 = vmatprep.subr.bf16.mxu0 0
    %820 = vmatpush1.bf16.msra.mxu0 0
    %821 = vmatprep.subr.bf16.mxu0 0
    %822 = vmatpush1.bf16.msra.mxu0 0
    %823 = vmatprep.subr.bf16.mxu0 0
    %824 = vmatpush1.bf16.msra.mxu0 0
    %825 = vmatprep.subr.bf16.mxu0 0
    %826 = vmatpush1.bf16.msra.mxu0 0
    %827 = vmatprep.subr.bf16.mxu0 0
    %828 = vmatpush1.bf16.msra.mxu0 0
    %829 = vmatprep.subr.bf16.mxu0 0
    %830 = vmatpush1.bf16.msra.mxu0 0
    %831 = vmatprep.subr.bf16.mxu0 0
    %832 = vmatpush1.bf16.msra.mxu0 0
    %833 = vmatprep.subr.bf16.mxu0 0
    %834 = vmatpush1.bf16.msra.mxu0 0
    %835 = vmatprep.mubr.bf16.mxu0 0
    %836 = vmatmul.mubr.bf16.gmra.mrb[0].mxu0 %v386
    %v837 = vpop.f32.mrb[0].mxu0
    %v838 = vadd.f32 0.0, %v837
    %v839 = vpop.f32.mrb[0].mxu0
    %v840 = vadd.f32 0.0, %v839
    %v841 = vpop.f32.mrb[0].mxu0
    %v842 = vadd.f32 0.0, %v841
    %v843 = vpop.f32.mrb[0].mxu0
    %v844 = vadd.f32 0.0, %v843
    %845 = vmatprep.mubr.bf16.mxu0 0
    %846 = vmatmul.mubr.bf16.gmra.mrb[0].mxu0 %v387
    %v847 = vpop.f32.mrb[0].mxu0
    %v848 = vadd.f32 0.0, %v847
    %v849 = vpop.f32.mrb[0].mxu0
    %v850 = vadd.f32 0.0, %v849
    %v851 = vpop.f32.mrb[0].mxu0
    %v852 = vadd.f32 0.0, %v851
    %v853 = vpop.f32.mrb[0].mxu0
    %v854 = vadd.f32 0.0, %v853
    %855 = vmatprep.mubr.bf16.mxu0 0
    %856 = vmatmul.mubr.bf16.gmra.mrb[0].mxu0 %v388
    %v857 = vpop.f32.mrb[0].mxu0
    %v858 = vadd.f32 0.0, %v857
    %v859 = vpop.f32.mrb[0].mxu0
    %v860 = vadd.f32 0.0, %v859
    %v861 = vpop.f32.mrb[0].mxu0
    %v862 = vadd.f32 0.0, %v861
    %v863 = vpop.f32.mrb[0].mxu0
    %v864 = vadd.f32 0.0, %v863
    %865 = vmatprep.mubr.bf16.mxu0 0
    %866 = vmatmul.mubr.bf16.gmra.mrb[0].mxu0 %v389
    %v867 = vpop.f32.mrb[0].mxu0
    %v868 = vadd.f32 0.0, %v867
    %v869 = vpop.f32.mrb[0].mxu0
    %v870 = vadd.f32 0.0, %v869
    %v871 = vpop.f32.mrb[0].mxu0
    %v872 = vadd.f32 0.0, %v871
    %v873 = vpop.f32.mrb[0].mxu0
    %v874 = vadd.f32 0.0, %v873
    %875 = vmatprep.mubr.bf16.mxu0 0
    %876 = vmatmul.mubr.bf16.gmra.mrb[0].mxu0 %v390
    %v877 = vpop.f32.mrb[0].mxu0
    %v878 = vadd.f32 0.0, %v877
    %v879 = vpop.f32.mrb[0].mxu0
    %v880 = vadd.f32 0.0, %v879
    %v881 = vpop.f32.mrb[0].mxu0
    %v882 = vadd.f32 0.0, %v881
    %v883 = vpop.f32.mrb[0].mxu0
    %v884 = vadd.f32 0.0, %v883
    %885 = vmatprep.mubr.bf16.mxu0 0
    %886 = vmatmul.mubr.bf16.gmra.mrb[0].mxu0 %v391
    %v887 = vpop.f32.mrb[0].mxu0
    %v888 = vadd.f32 0.0, %v887
    %v889 = vpop.f32.mrb[0].mxu0
    %v890 = vadd.f32 0.0, %v889
    %v891 = vpop.f32.mrb[0].mxu0
    %v892 = vadd.f32 0.0, %v891
    %v893 = vpop.f32.mrb[0].mxu0
    %v894 = vadd.f32 0.0, %v893
    %895 = vmatprep.mubr.bf16.mxu0 0
    %896 = vmatmul.mubr.bf16.gmra.mrb[0].mxu0 %v392
    %v897 = vpop.f32.mrb[0].mxu0
    %v898 = vadd.f32 0.0, %v897
    %v899 = vpop.f32.mrb[0].mxu0
    %v900 = vadd.f32 0.0, %v899
    %v901 = vpop.f32.mrb[0].mxu0
    %v902 = vadd.f32 0.0, %v901
    %v903 = vpop.f32.mrb[0].mxu0
    %v904 = vadd.f32 0.0, %v903
    %905 = vmatprep.mubr.bf16.mxu0 0
    %906 = vmatmul.mubr.bf16.gmra.mrb[0].mxu0 %v393
    %v907 = vpop.f32.mrb[0].mxu0
    %v908 = vadd.f32 0.0, %v907
    %v909 = vpop.f32.mrb[0].mxu0
    %v910 = vadd.f32 0.0, %v909
    %v911 = vpop.f32.mrb[0].mxu0
    %v912 = vadd.f32 0.0, %v911
    %v913 = vpop.f32.mrb[0].mxu0
    %v914 = vadd.f32 0.0, %v913
    %915 = vmatprep.mubr.bf16.mxu0 0
    %916 = vmatmul.mubr.bf16.gmra.mrb[0].mxu0 %v394
    %v917 = vpop.f32.mrb[0].mxu0
    %v918 = vadd.f32 0.0, %v917
    %v919 = vpop.f32.mrb[0].mxu0
    %v920 = vadd.f32 0.0, %v919
    %v921 = vpop.f32.mrb[0].mxu0
    %v922 = vadd.f32 0.0, %v921
    %v923 = vpop.f32.mrb[0].mxu0
    %v924 = vadd.f32 0.0, %v923
    %925 = vmatprep.mubr.bf16.mxu0 0
    %926 = vmatmul.mubr.bf16.gmra.mrb[0].mxu0 %v395
    %v927 = vpop.f32.mrb[0].mxu0
    %v928 = vadd.f32 0.0, %v927
    %v929 = vpop.f32.mrb[0].mxu0
    %v930 = vadd.f32 0.0, %v929
    %v931 = vpop.f32.mrb[0].mxu0
    %v932 = vadd.f32 0.0, %v931
    %v933 = vpop.f32.mrb[0].mxu0
    %v934 = vadd.f32 0.0, %v933
    %935 = vmatprep.mubr.bf16.mxu0 0
    %936 = vmatmul.mubr.bf16.gmra.mrb[0].mxu0 %v396
    %v937 = vpop.f32.mrb[0].mxu0
    %v938 = vadd.f32 0.0, %v937
    %v939 = vpop.f32.mrb[0].mxu0
    %v940 = vadd.f32 0.0, %v939
    %v941 = vpop.f32.mrb[0].mxu0
    %v942 = vadd.f32 0.0, %v941
    %v943 = vpop.f32.mrb[0].mxu0
    %v944 = vadd.f32 0.0, %v943
    %945 = vmatprep.mubr.bf16.mxu0 0
    %946 = vmatmul.mubr.bf16.gmra.mrb[0].mxu0 %v397
    %v947 = vpop.f32.mrb[0].mxu0
    %v948 = vadd.f32 0.0, %v947
    %v949 = vpop.f32.mrb[0].mxu0
    %v950 = vadd.f32 0.0, %v949
    %v951 = vpop.f32.mrb[0].mxu0
    %v952 = vadd.f32 0.0, %v951
    %v953 = vpop.f32.mrb[0].mxu0
    %v954 = vadd.f32 0.0, %v953
    %955 = vmatprep.mubr.bf16.mxu0 0
    %956 = vmatmul.mubr.bf16.gmra.mrb[0].mxu0 %v398
    %v957 = vpop.f32.mrb[0].mxu0
    %v958 = vadd.f32 0.0, %v957
    %v959 = vpop.f32.mrb[0].mxu0
    %v960 = vadd.f32 0.0, %v959
    %v961 = vpop.f32.mrb[0].mxu0
    %v962 = vadd.f32 0.0, %v961
    %v963 = vpop.f32.mrb[0].mxu0
    %v964 = vadd.f32 0.0, %v963
    %965 = vmatprep.mubr.bf16.mxu0 0
    %966 = vmatmul.mubr.bf16.gmra.mrb[0].mxu0 %v399
    %v967 = vpop.f32.mrb[0].mxu0
    %v968 = vadd.f32 0.0, %v967
    %v969 = vpop.f32.mrb[0].mxu0
    %v970 = vadd.f32 0.0, %v969
    %v971 = vpop.f32.mrb[0].mxu0
    %v972 = vadd.f32 0.0, %v971
    %v973 = vpop.f32.mrb[0].mxu0
    %v974 = vadd.f32 0.0, %v973
    %975 = vmatprep.mubr.bf16.mxu0 0
    %976 = vmatmul.mubr.bf16.gmra.mrb[0].mxu0 %v400
    %v977 = vpop.f32.mrb[0].mxu0
    %v978 = vadd.f32 0.0, %v977
    %v979 = vpop.f32.mrb[0].mxu0
    %v980 = vadd.f32 0.0, %v979
    %v981 = vpop.f32.mrb[0].mxu0
    %v982 = vadd.f32 0.0, %v981
    %v983 = vpop.f32.mrb[0].mxu0
    %v984 = vadd.f32 0.0, %v983
    %985 = vmatprep.mubr.bf16.mxu0 0
    %986 = vmatmul.mubr.bf16.gmra.mrb[0].mxu0 %v401
    %v987 = vpop.f32.mrb[0].mxu0
    %v988 = vadd.f32 0.0, %v987
    %v989 = vpop.f32.mrb[0].mxu0
    %v990 = vadd.f32 0.0, %v989
    %v991 = vpop.f32.mrb[0].mxu0
    %v992 = vadd.f32 0.0, %v991
    %v993 = vpop.f32.mrb[0].mxu0
    %v994 = vadd.f32 0.0, %v993
    %995 = vmatprep.mubr.bf16.mxu0 0
    %996 = vmatmul.mubr.bf16.gmra.mrb[0].mxu0 %v402
    %v997 = vpop.f32.mrb[0].mxu0
    %v998 = vadd.f32 0.0, %v997
    %v999 = vpop.f32.mrb[0].mxu0
    %v1000 = vadd.f32 0.0, %v999
    %v1001 = vpop.f32.mrb[0].mxu0
    %v1002 = vadd.f32 0.0, %v1001
    %v1003 = vpop.f32.mrb[0].mxu0
    %v1004 = vadd.f32 0.0, %v1003
    %1005 = vmatprep.mubr.bf16.mxu0 0
    %1006 = vmatmul.mubr.bf16.gmra.mrb[0].mxu0 %v403
    %v1007 = vpop.f32.mrb[0].mxu0
    %v1008 = vadd.f32 0.0, %v1007
    %v1009 = vpop.f32.mrb[0].mxu0
    %v1010 = vadd.f32 0.0, %v1009
    %v1011 = vpop.f32.mrb[0].mxu0
    %v1012 = vadd.f32 0.0, %v1011
    %v1013 = vpop.f32.mrb[0].mxu0
    %v1014 = vadd.f32 0.0, %v1013
    %1015 = vmatprep.mubr.bf16.mxu0 0
    %1016 = vmatmul.mubr.bf16.gmra.mrb[0].mxu0 %v404
    %v1017 = vpop.f32.mrb[0].mxu0
    %v1018 = vadd.f32 0.0, %v1017
    %v1019 = vpop.f32.mrb[0].mxu0
    %v1020 = vadd.f32 0.0, %v1019
    %v1021 = vpop.f32.mrb[0].mxu0
    %v1022 = vadd.f32 0.0, %v1021
    %v1023 = vpop.f32.mrb[0].mxu0
    %v1024 = vadd.f32 0.0, %v1023
    %1025 = vmatprep.mubr.bf16.mxu0 0
    %1026 = vmatmul.mubr.bf16.gmra.mrb[0].mxu0 %v405
    %v1027 = vpop.f32.mrb[0].mxu0
    %v1028 = vadd.f32 0.0, %v1027
    %v1029 = vpop.f32.mrb[0].mxu0
    %v1030 = vadd.f32 0.0, %v1029
    %v1031 = vpop.f32.mrb[0].mxu0
    %v1032 = vadd.f32 0.0, %v1031
    %v1033 = vpop.f32.mrb[0].mxu0
    %v1034 = vadd.f32 0.0, %v1033
    %1035 = vmatprep.mubr.bf16.mxu0 0
    %1036 = vmatmul.mubr.bf16.gmra.mrb[0].mxu0 %v406
    %v1037 = vpop.f32.mrb[0].mxu0
    %v1038 = vadd.f32 0.0, %v1037
    %v1039 = vpop.f32.mrb[0].mxu0
    %v1040 = vadd.f32 0.0, %v1039
    %v1041 = vpop.f32.mrb[0].mxu0
    %v1042 = vadd.f32 0.0, %v1041
    %v1043 = vpop.f32.mrb[0].mxu0
    %v1044 = vadd.f32 0.0, %v1043
    %1045 = vmatprep.mubr.bf16.mxu0 0
    %1046 = vmatmul.mubr.bf16.gmra.mrb[0].mxu0 %v407
    %v1047 = vpop.f32.mrb[0].mxu0
    %v1048 = vadd.f32 0.0, %v1047
    %v1049 = vpop.f32.mrb[0].mxu0
    %v1050 = vadd.f32 0.0, %v1049
    %v1051 = vpop.f32.mrb[0].mxu0
    %v1052 = vadd.f32 0.0, %v1051
    %v1053 = vpop.f32.mrb[0].mxu0
    %v1054 = vadd.f32 0.0, %v1053
    %1055 = vmatprep.mubr.bf16.mxu0 0
    %1056 = vmatmul.mubr.bf16.gmra.mrb[0].mxu0 %v408
    %v1057 = vpop.f32.mrb[0].mxu0
    %v1058 = vadd.f32 0.0, %v1057
    %v1059 = vpop.f32.mrb[0].mxu0
    %v1060 = vadd.f32 0.0, %v1059
    %v1061 = vpop.f32.mrb[0].mxu0
    %v1062 = vadd.f32 0.0, %v1061
    %v1063 = vpop.f32.mrb[0].mxu0
    %v1064 = vadd.f32 0.0, %v1063
    %1065 = vmatprep.mubr.bf16.mxu0 0
    %1066 = vmatmul.mubr.bf16.gmra.mrb[0].mxu0 %v409
    %v1067 = vpop.f32.mrb[0].mxu0
    %v1068 = vadd.f32 0.0, %v1067
    %v1069 = vpop.f32.mrb[0].mxu0
    %v1070 = vadd.f32 0.0, %v1069
    %v1071 = vpop.f32.mrb[0].mxu0
    %v1072 = vadd.f32 0.0, %v1071
    %v1073 = vpop.f32.mrb[0].mxu0
    %v1074 = vadd.f32 0.0, %v1073
    %1075 = vmatprep.mubr.bf16.mxu0 0
    %1076 = vmatmul.mubr.bf16.gmra.mrb[0].mxu0 %v410
    %v1077 = vpop.f32.mrb[0].mxu0
    %v1078 = vadd.f32 0.0, %v1077
    %v1079 = vpop.f32.mrb[0].mxu0
    %v1080 = vadd.f32 0.0, %v1079
    %v1081 = vpop.f32.mrb[0].mxu0
    %v1082 = vadd.f32 0.0, %v1081
    %v1083 = vpop.f32.mrb[0].mxu0
    %v1084 = vadd.f32 0.0, %v1083
    %1085 = vmatprep.mubr.bf16.mxu0 0
    %1086 = vmatmul.mubr.bf16.gmra.mrb[0].mxu0 %v411
    %v1087 = vpop.f32.mrb[0].mxu0
    %v1088 = vadd.f32 0.0, %v1087
    %v1089 = vpop.f32.mrb[0].mxu0
    %v1090 = vadd.f32 0.0, %v1089
    %v1091 = vpop.f32.mrb[0].mxu0
    %v1092 = vadd.f32 0.0, %v1091
    %v1093 = vpop.f32.mrb[0].mxu0
    %v1094 = vadd.f32 0.0, %v1093
    %1095 = vmatprep.mubr.bf16.mxu0 0
    %1096 = vmatmul.mubr.bf16.gmra.mrb[0].mxu0 %v412
    %v1097 = vpop.f32.mrb[0].mxu0
    %v1098 = vadd.f32 0.0, %v1097
    %v1099 = vpop.f32.mrb[0].mxu0
    %v1100 = vadd.f32 0.0, %v1099
    %v1101 = vpop.f32.mrb[0].mxu0
    %v1102 = vadd.f32 0.0, %v1101
    %v1103 = vpop.f32.mrb[0].mxu0
    %v1104 = vadd.f32 0.0, %v1103
    %1105 = vmatprep.mubr.bf16.mxu0 0
    %1106 = vmatmul.mubr.bf16.gmra.mrb[0].mxu0 %v413
    %v1107 = vpop.f32.mrb[0].mxu0
    %v1108 = vadd.f32 0.0, %v1107
    %v1109 = vpop.f32.mrb[0].mxu0
    %v1110 = vadd.f32 0.0, %v1109
    %v1111 = vpop.f32.mrb[0].mxu0
    %v1112 = vadd.f32 0.0, %v1111
    %v1113 = vpop.f32.mrb[0].mxu0
    %v1114 = vadd.f32 0.0, %v1113
    %1115 = vmatprep.mubr.bf16.mxu0 0
    %1116 = vmatmul.mubr.bf16.gmra.mrb[0].mxu0 %v414
    %v1117 = vpop.f32.mrb[0].mxu0
    %v1118 = vadd.f32 0.0, %v1117
    %v1119 = vpop.f32.mrb[0].mxu0
    %v1120 = vadd.f32 0.0, %v1119
    %v1121 = vpop.f32.mrb[0].mxu0
    %v1122 = vadd.f32 0.0, %v1121
    %v1123 = vpop.f32.mrb[0].mxu0
    %v1124 = vadd.f32 0.0, %v1123
    %1125 = vmatprep.mubr.bf16.mxu0 0
    %1126 = vmatmul.mubr.bf16.gmra.mrb[0].mxu0 %v415
    %v1127 = vpop.f32.mrb[0].mxu0
    %v1128 = vadd.f32 0.0, %v1127
    %v1129 = vpop.f32.mrb[0].mxu0
    %v1130 = vadd.f32 0.0, %v1129
    %v1131 = vpop.f32.mrb[0].mxu0
    %v1132 = vadd.f32 0.0, %v1131
    %v1133 = vpop.f32.mrb[0].mxu0
    %v1134 = vadd.f32 0.0, %v1133
    %1135 = vmatprep.mubr.bf16.mxu0 0
    %1136 = vmatmul.mubr.bf16.gmra.mrb[0].mxu0 %v416
    %v1137 = vpop.f32.mrb[0].mxu0
    %v1138 = vadd.f32 0.0, %v1137
    %v1139 = vpop.f32.mrb[0].mxu0
    %v1140 = vadd.f32 0.0, %v1139
    %v1141 = vpop.f32.mrb[0].mxu0
    %v1142 = vadd.f32 0.0, %v1141
    %v1143 = vpop.f32.mrb[0].mxu0
    %v1144 = vadd.f32 0.0, %v1143
    %1145 = vmatprep.mubr.bf16.mxu0 0
    %1146 = vmatmul.mubr.bf16.gmra.mrb[0].mxu0 %v417
    %v1147 = vpop.f32.mrb[0].mxu0
    %v1148 = vadd.f32 0.0, %v1147
    %v1149 = vpop.f32.mrb[0].mxu0
    %v1150 = vadd.f32 0.0, %v1149
    %v1151 = vpop.f32.mrb[0].mxu0
    %v1152 = vadd.f32 0.0, %v1151
    %v1153 = vpop.f32.mrb[0].mxu0
    %v1154 = vadd.f32 0.0, %v1153
    %1155 = vdwg.mxu0
    %1156 = vmatprep.subr.bf16.mxu0 %v143
    %1157 = vmatpush1.bf16.msra.mxu0 %v142
    %1158 = vmatprep.subr.bf16.mxu0 %v150
    %1159 = vmatpush1.bf16.msra.mxu0 %v149
    %1160 = vmatprep.subr.bf16.mxu0 %v157
    %1161 = vmatpush1.bf16.msra.mxu0 %v156
    %1162 = vmatprep.subr.bf16.mxu0 %v164
    %1163 = vmatpush1.bf16.msra.mxu0 %v163
    %1164 = vmatprep.subr.bf16.mxu0 %v171
    %1165 = vmatpush1.bf16.msra.mxu0 %v170
    %1166 = vmatprep.subr.bf16.mxu0 %v178
    %1167 = vmatpush1.bf16.msra.mxu0 %v177
    %1168 = vmatprep.subr.bf16.mxu0 %v185
    %1169 = vmatpush1.bf16.msra.mxu0 %v184
    %1170 = vmatprep.subr.bf16.mxu0 %v192
    %1171 = vmatpush1.bf16.msra.mxu0 %v191
    %1172 = vmatprep.subr.bf16.mxu0 0
    %1173 = vmatpush1.bf16.msra.mxu0 0
    %1174 = vmatprep.subr.bf16.mxu0 0
    %1175 = vmatpush1.bf16.msra.mxu0 0
    %1176 = vmatprep.subr.bf16.mxu0 0
    %1177 = vmatpush1.bf16.msra.mxu0 0
    %1178 = vmatprep.subr.bf16.mxu0 0
    %1179 = vmatpush1.bf16.msra.mxu0 0
    %1180 = vmatprep.subr.bf16.mxu0 0
    %1181 = vmatpush1.bf16.msra.mxu0 0
    %1182 = vmatprep.subr.bf16.mxu0 0
    %1183 = vmatpush1.bf16.msra.mxu0 0
    %1184 = vmatprep.subr.bf16.mxu0 0
    %1185 = vmatpush1.bf16.msra.mxu0 0
    %1186 = vmatprep.subr.bf16.mxu0 0
    %1187 = vmatpush1.bf16.msra.mxu0 0
    %1188 = vmatprep.mubr.bf16.mxu0 0
    %1189 = vmatmul.mubr.bf16.gmra.mrb[0].mxu0 %v386
    %v1190 = vpop.f32.mrb[0].mxu0
    %v1191 = vadd.f32 0.0, %v1190
    %v1192 = vpop.f32.mrb[0].mxu0
    %v1193 = vadd.f32 0.0, %v1192
    %v1194 = vpop.f32.mrb[0].mxu0
    %v1195 = vadd.f32 0.0, %v1194
    %v1196 = vpop.f32.mrb[0].mxu0
    %v1197 = vadd.f32 0.0, %v1196
    %1198 = vmatprep.mubr.bf16.mxu0 0
    %1199 = vmatmul.mubr.bf16.gmra.mrb[0].mxu0 %v387
    %v1200 = vpop.f32.mrb[0].mxu0
    %v1201 = vadd.f32 0.0, %v1200
    %v1202 = vpop.f32.mrb[0].mxu0
    %v1203 = vadd.f32 0.0, %v1202
    %v1204 = vpop.f32.mrb[0].mxu0
    %v1205 = vadd.f32 0.0, %v1204
    %v1206 = vpop.f32.mrb[0].mxu0
    %v1207 = vadd.f32 0.0, %v1206
    %1208 = vmatprep.mubr.bf16.mxu0 0
    %1209 = vmatmul.mubr.bf16.gmra.mrb[0].mxu0 %v388
    %v1210 = vpop.f32.mrb[0].mxu0
    %v1211 = vadd.f32 0.0, %v1210
    %v1212 = vpop.f32.mrb[0].mxu0
    %v1213 = vadd.f32 0.0, %v1212
    %v1214 = vpop.f32.mrb[0].mxu0
    %v1215 = vadd.f32 0.0, %v1214
    %v1216 = vpop.f32.mrb[0].mxu0
    %v1217 = vadd.f32 0.0, %v1216
    %1218 = vmatprep.mubr.bf16.mxu0 0
    %1219 = vmatmul.mubr.bf16.gmra.mrb[0].mxu0 %v389
    %v1220 = vpop.f32.mrb[0].mxu0
    %v1221 = vadd.f32 0.0, %v1220
    %v1222 = vpop.f32.mrb[0].mxu0
    %v1223 = vadd.f32 0.0, %v1222
    %v1224 = vpop.f32.mrb[0].mxu0
    %v1225 = vadd.f32 0.0, %v1224
    %v1226 = vpop.f32.mrb[0].mxu0
    %v1227 = vadd.f32 0.0, %v1226
    %1228 = vmatprep.mubr.bf16.mxu0 0
    %1229 = vmatmul.mubr.bf16.gmra.mrb[0].mxu0 %v390
    %v1230 = vpop.f32.mrb[0].mxu0
    %v1231 = vadd.f32 0.0, %v1230
    %v1232 = vpop.f32.mrb[0].mxu0
    %v1233 = vadd.f32 0.0, %v1232
    %v1234 = vpop.f32.mrb[0].mxu0
    %v1235 = vadd.f32 0.0, %v1234
    %v1236 = vpop.f32.mrb[0].mxu0
    %v1237 = vadd.f32 0.0, %v1236
    %1238 = vmatprep.mubr.bf16.mxu0 0
    %1239 = vmatmul.mubr.bf16.gmra.mrb[0].mxu0 %v391
    %v1240 = vpop.f32.mrb[0].mxu0
    %v1241 = vadd.f32 0.0, %v1240
    %v1242 = vpop.f32.mrb[0].mxu0
    %v1243 = vadd.f32 0.0, %v1242
    %v1244 = vpop.f32.mrb[0].mxu0
    %v1245 = vadd.f32 0.0, %v1244
    %v1246 = vpop.f32.mrb[0].mxu0
    %v1247 = vadd.f32 0.0, %v1246
    %1248 = vmatprep.mubr.bf16.mxu0 0
    %1249 = vmatmul.mubr.bf16.gmra.mrb[0].mxu0 %v392
    %v1250 = vpop.f32.mrb[0].mxu0
    %v1251 = vadd.f32 0.0, %v1250
    %v1252 = vpop.f32.mrb[0].mxu0
    %v1253 = vadd.f32 0.0, %v1252
    %v1254 = vpop.f32.mrb[0].mxu0
    %v1255 = vadd.f32 0.0, %v1254
    %v1256 = vpop.f32.mrb[0].mxu0
    %v1257 = vadd.f32 0.0, %v1256
    %1258 = vmatprep.mubr.bf16.mxu0 0
    %1259 = vmatmul.mubr.bf16.gmra.mrb[0].mxu0 %v393
    %v1260 = vpop.f32.mrb[0].mxu0
    %v1261 = vadd.f32 0.0, %v1260
    %v1262 = vpop.f32.mrb[0].mxu0
    %v1263 = vadd.f32 0.0, %v1262
    %v1264 = vpop.f32.mrb[0].mxu0
    %v1265 = vadd.f32 0.0, %v1264
    %v1266 = vpop.f32.mrb[0].mxu0
    %v1267 = vadd.f32 0.0, %v1266
    %1268 = vmatprep.mubr.bf16.mxu0 0
    %1269 = vmatmul.mubr.bf16.gmra.mrb[0].mxu0 %v394
    %v1270 = vpop.f32.mrb[0].mxu0
    %v1271 = vadd.f32 0.0, %v1270
    %v1272 = vpop.f32.mrb[0].mxu0
    %v1273 = vadd.f32 0.0, %v1272
    %v1274 = vpop.f32.mrb[0].mxu0
    %v1275 = vadd.f32 0.0, %v1274
    %v1276 = vpop.f32.mrb[0].mxu0
    %v1277 = vadd.f32 0.0, %v1276
    %1278 = vmatprep.mubr.bf16.mxu0 0
    %1279 = vmatmul.mubr.bf16.gmra.mrb[0].mxu0 %v395
    %v1280 = vpop.f32.mrb[0].mxu0
    %v1281 = vadd.f32 0.0, %v1280
    %v1282 = vpop.f32.mrb[0].mxu0
    %v1283 = vadd.f32 0.0, %v1282
    %v1284 = vpop.f32.mrb[0].mxu0
    %v1285 = vadd.f32 0.0, %v1284
    %v1286 = vpop.f32.mrb[0].mxu0
    %v1287 = vadd.f32 0.0, %v1286
    %1288 = vmatprep.mubr.bf16.mxu0 0
    %1289 = vmatmul.mubr.bf16.gmra.mrb[0].mxu0 %v396
    %v1290 = vpop.f32.mrb[0].mxu0
    %v1291 = vadd.f32 0.0, %v1290
    %v1292 = vpop.f32.mrb[0].mxu0
    %v1293 = vadd.f32 0.0, %v1292
    %v1294 = vpop.f32.mrb[0].mxu0
    %v1295 = vadd.f32 0.0, %v1294
    %v1296 = vpop.f32.mrb[0].mxu0
    %v1297 = vadd.f32 0.0, %v1296
    %1298 = vmatprep.mubr.bf16.mxu0 0
    %1299 = vmatmul.mubr.bf16.gmra.mrb[0].mxu0 %v397
    %v1300 = vpop.f32.mrb[0].mxu0
    %v1301 = vadd.f32 0.0, %v1300
    %v1302 = vpop.f32.mrb[0].mxu0
    %v1303 = vadd.f32 0.0, %v1302
    %v1304 = vpop.f32.mrb[0].mxu0
    %v1305 = vadd.f32 0.0, %v1304
    %v1306 = vpop.f32.mrb[0].mxu0
    %v1307 = vadd.f32 0.0, %v1306
    %1308 = vmatprep.mubr.bf16.mxu0 0
    %1309 = vmatmul.mubr.bf16.gmra.mrb[0].mxu0 %v398
    %v1310 = vpop.f32.mrb[0].mxu0
    %v1311 = vadd.f32 0.0, %v1310
    %v1312 = vpop.f32.mrb[0].mxu0
    %v1313 = vadd.f32 0.0, %v1312
    %v1314 = vpop.f32.mrb[0].mxu0
    %v1315 = vadd.f32 0.0, %v1314
    %v1316 = vpop.f32.mrb[0].mxu0
    %v1317 = vadd.f32 0.0, %v1316
    %1318 = vmatprep.mubr.bf16.mxu0 0
    %1319 = vmatmul.mubr.bf16.gmra.mrb[0].mxu0 %v399
    %v1320 = vpop.f32.mrb[0].mxu0
    %v1321 = vadd.f32 0.0, %v1320
    %v1322 = vpop.f32.mrb[0].mxu0
    %v1323 = vadd.f32 0.0, %v1322
    %v1324 = vpop.f32.mrb[0].mxu0
    %v1325 = vadd.f32 0.0, %v1324
    %v1326 = vpop.f32.mrb[0].mxu0
    %v1327 = vadd.f32 0.0, %v1326
    %1328 = vmatprep.mubr.bf16.mxu0 0
    %1329 = vmatmul.mubr.bf16.gmra.mrb[0].mxu0 %v400
    %v1330 = vpop.f32.mrb[0].mxu0
    %v1331 = vadd.f32 0.0, %v1330
    %v1332 = vpop.f32.mrb[0].mxu0
    %v1333 = vadd.f32 0.0, %v1332
    %v1334 = vpop.f32.mrb[0].mxu0
    %v1335 = vadd.f32 0.0, %v1334
    %v1336 = vpop.f32.mrb[0].mxu0
    %v1337 = vadd.f32 0.0, %v1336
    %1338 = vmatprep.mubr.bf16.mxu0 0
    %1339 = vmatmul.mubr.bf16.gmra.mrb[0].mxu0 %v401
    %v1340 = vpop.f32.mrb[0].mxu0
    %v1341 = vadd.f32 0.0, %v1340
    %v1342 = vpop.f32.mrb[0].mxu0
    %v1343 = vadd.f32 0.0, %v1342
    %v1344 = vpop.f32.mrb[0].mxu0
    %v1345 = vadd.f32 0.0, %v1344
    %v1346 = vpop.f32.mrb[0].mxu0
    %v1347 = vadd.f32 0.0, %v1346
    %1348 = vmatprep.mubr.bf16.mxu0 0
    %1349 = vmatmul.mubr.bf16.gmra.mrb[0].mxu0 %v402
    %v1350 = vpop.f32.mrb[0].mxu0
    %v1351 = vadd.f32 0.0, %v1350
    %v1352 = vpop.f32.mrb[0].mxu0
    %v1353 = vadd.f32 0.0, %v1352
    %v1354 = vpop.f32.mrb[0].mxu0
    %v1355 = vadd.f32 0.0, %v1354
    %v1356 = vpop.f32.mrb[0].mxu0
    %v1357 = vadd.f32 0.0, %v1356
    %1358 = vmatprep.mubr.bf16.mxu0 0
    %1359 = vmatmul.mubr.bf16.gmra.mrb[0].mxu0 %v403
    %v1360 = vpop.f32.mrb[0].mxu0
    %v1361 = vadd.f32 0.0, %v1360
    %v1362 = vpop.f32.mrb[0].mxu0
    %v1363 = vadd.f32 0.0, %v1362
    %v1364 = vpop.f32.mrb[0].mxu0
    %v1365 = vadd.f32 0.0, %v1364
    %v1366 = vpop.f32.mrb[0].mxu0
    %v1367 = vadd.f32 0.0, %v1366
    %1368 = vmatprep.mubr.bf16.mxu0 0
    %1369 = vmatmul.mubr.bf16.gmra.mrb[0].mxu0 %v404
    %v1370 = vpop.f32.mrb[0].mxu0
    %v1371 = vadd.f32 0.0, %v1370
    %v1372 = vpop.f32.mrb[0].mxu0
    %v1373 = vadd.f32 0.0, %v1372
    %v1374 = vpop.f32.mrb[0].mxu0
    %v1375 = vadd.f32 0.0, %v1374
    %v1376 = vpop.f32.mrb[0].mxu0
    %v1377 = vadd.f32 0.0, %v1376
    %1378 = vmatprep.mubr.bf16.mxu0 0
    %1379 = vmatmul.mubr.bf16.gmra.mrb[0].mxu0 %v405
    %v1380 = vpop.f32.mrb[0].mxu0
    %v1381 = vadd.f32 0.0, %v1380
    %v1382 = vpop.f32.mrb[0].mxu0
    %v1383 = vadd.f32 0.0, %v1382
    %v1384 = vpop.f32.mrb[0].mxu0
    %v1385 = vadd.f32 0.0, %v1384
    %v1386 = vpop.f32.mrb[0].mxu0
    %v1387 = vadd.f32 0.0, %v1386
    %1388 = vmatprep.mubr.bf16.mxu0 0
    %1389 = vmatmul.mubr.bf16.gmra.mrb[0].mxu0 %v406
    %v1390 = vpop.f32.mrb[0].mxu0
    %v1391 = vadd.f32 0.0, %v1390
    %v1392 = vpop.f32.mrb[0].mxu0
    %v1393 = vadd.f32 0.0, %v1392
    %v1394 = vpop.f32.mrb[0].mxu0
    %v1395 = vadd.f32 0.0, %v1394
    %v1396 = vpop.f32.mrb[0].mxu0
    %v1397 = vadd.f32 0.0, %v1396
    %1398 = vmatprep.mubr.bf16.mxu0 0
    %1399 = vmatmul.mubr.bf16.gmra.mrb[0].mxu0 %v407
    %v1400 = vpop.f32.mrb[0].mxu0
    %v1401 = vadd.f32 0.0, %v1400
    %v1402 = vpop.f32.mrb[0].mxu0
    %v1403 = vadd.f32 0.0, %v1402
    %v1404 = vpop.f32.mrb[0].mxu0
    %v1405 = vadd.f32 0.0, %v1404
    %v1406 = vpop.f32.mrb[0].mxu0
    %v1407 = vadd.f32 0.0, %v1406
    %1408 = vmatprep.mubr.bf16.mxu0 0
    %1409 = vmatmul.mubr.bf16.gmra.mrb[0].mxu0 %v408
    %v1410 = vpop.f32.mrb[0].mxu0
    %v1411 = vadd.f32 0.0, %v1410
    %v1412 = vpop.f32.mrb[0].mxu0
    %v1413 = vadd.f32 0.0, %v1412
    %v1414 = vpop.f32.mrb[0].mxu0
    %v1415 = vadd.f32 0.0, %v1414
    %v1416 = vpop.f32.mrb[0].mxu0
    %v1417 = vadd.f32 0.0, %v1416
    %1418 = vmatprep.mubr.bf16.mxu0 0
    %1419 = vmatmul.mubr.bf16.gmra.mrb[0].mxu0 %v409
    %v1420 = vpop.f32.mrb[0].mxu0
    %v1421 = vadd.f32 0.0, %v1420
    %v1422 = vpop.f32.mrb[0].mxu0
    %v1423 = vadd.f32 0.0, %v1422
    %v1424 = vpop.f32.mrb[0].mxu0
    %v1425 = vadd.f32 0.0, %v1424
    %v1426 = vpop.f32.mrb[0].mxu0
    %v1427 = vadd.f32 0.0, %v1426
    %1428 = vmatprep.mubr.bf16.mxu0 0
    %1429 = vmatmul.mubr.bf16.gmra.mrb[0].mxu0 %v410
    %v1430 = vpop.f32.mrb[0].mxu0
    %v1431 = vadd.f32 0.0, %v1430
    %v1432 = vpop.f32.mrb[0].mxu0
    %v1433 = vadd.f32 0.0, %v1432
    %v1434 = vpop.f32.mrb[0].mxu0
    %v1435 = vadd.f32 0.0, %v1434
    %v1436 = vpop.f32.mrb[0].mxu0
    %v1437 = vadd.f32 0.0, %v1436
    %1438 = vmatprep.mubr.bf16.mxu0 0
    %1439 = vmatmul.mubr.bf16.gmra.mrb[0].mxu0 %v411
    %v1440 = vpop.f32.mrb[0].mxu0
    %v1441 = vadd.f32 0.0, %v1440
    %v1442 = vpop.f32.mrb[0].mxu0
    %v1443 = vadd.f32 0.0, %v1442
    %v1444 = vpop.f32.mrb[0].mxu0
    %v1445 = vadd.f32 0.0, %v1444
    %v1446 = vpop.f32.mrb[0].mxu0
    %v1447 = vadd.f32 0.0, %v1446
    %1448 = vmatprep.mubr.bf16.mxu0 0
    %1449 = vmatmul.mubr.bf16.gmra.mrb[0].mxu0 %v412
    %v1450 = vpop.f32.mrb[0].mxu0
    %v1451 = vadd.f32 0.0, %v1450
    %v1452 = vpop.f32.mrb[0].mxu0
    %v1453 = vadd.f32 0.0, %v1452
    %v1454 = vpop.f32.mrb[0].mxu0
    %v1455 = vadd.f32 0.0, %v1454
    %v1456 = vpop.f32.mrb[0].mxu0
    %v1457 = vadd.f32 0.0, %v1456
    %1458 = vmatprep.mubr.bf16.mxu0 0
    %1459 = vmatmul.mubr.bf16.gmra.mrb[0].mxu0 %v413
    %v1460 = vpop.f32.mrb[0].mxu0
    %v1461 = vadd.f32 0.0, %v1460
    %v1462 = vpop.f32.mrb[0].mxu0
    %v1463 = vadd.f32 0.0, %v1462
    %v1464 = vpop.f32.mrb[0].mxu0
    %v1465 = vadd.f32 0.0, %v1464
    %v1466 = vpop.f32.mrb[0].mxu0
    %v1467 = vadd.f32 0.0, %v1466
    %1468 = vmatprep.mubr.bf16.mxu0 0
    %1469 = vmatmul.mubr.bf16.gmra.mrb[0].mxu0 %v414
    %v1470 = vpop.f32.mrb[0].mxu0
    %v1471 = vadd.f32 0.0, %v1470
    %v1472 = vpop.f32.mrb[0].mxu0
    %v1473 = vadd.f32 0.0, %v1472
    %v1474 = vpop.f32.mrb[0].mxu0
    %v1475 = vadd.f32 0.0, %v1474
    %v1476 = vpop.f32.mrb[0].mxu0
    %v1477 = vadd.f32 0.0, %v1476
    %1478 = vmatprep.mubr.bf16.mxu0 0
    %1479 = vmatmul.mubr.bf16.gmra.mrb[0].mxu0 %v415
    %v1480 = vpop.f32.mrb[0].mxu0
    %v1481 = vadd.f32 0.0, %v1480
    %v1482 = vpop.f32.mrb[0].mxu0
    %v1483 = vadd.f32 0.0, %v1482
    %v1484 = vpop.f32.mrb[0].mxu0
    %v1485 = vadd.f32 0.0, %v1484
    %v1486 = vpop.f32.mrb[0].mxu0
    %v1487 = vadd.f32 0.0, %v1486
    %1488 = vmatprep.mubr.bf16.mxu0 0
    %1489 = vmatmul.mubr.bf16.gmra.mrb[0].mxu0 %v416
    %v1490 = vpop.f32.mrb[0].mxu0
    %v1491 = vadd.f32 0.0, %v1490
    %v1492 = vpop.f32.mrb[0].mxu0
    %v1493 = vadd.f32 0.0, %v1492
    %v1494 = vpop.f32.mrb[0].mxu0
    %v1495 = vadd.f32 0.0, %v1494
    %v1496 = vpop.f32.mrb[0].mxu0
    %v1497 = vadd.f32 0.0, %v1496
    %1498 = vmatprep.mubr.bf16.mxu0 0
    %1499 = vmatmul.mubr.bf16.gmra.mrb[0].mxu0 %v417
    %v1500 = vpop.f32.mrb[0].mxu0
    %v1501 = vadd.f32 0.0, %v1500
    %v1502 = vpop.f32.mrb[0].mxu0
    %v1503 = vadd.f32 0.0, %v1502
    %v1504 = vpop.f32.mrb[0].mxu0
    %v1505 = vadd.f32 0.0, %v1504
    %v1506 = vpop.f32.mrb[0].mxu0
    %v1507 = vadd.f32 0.0, %v1506
    %1508 = vdwg.mxu0
    %1509 = vmatprep.subr.bf16.mxu0 0
    %1510 = vmatpush1.bf16.msra.mxu0 %v144
    %1511 = vmatprep.subr.bf16.mxu0 0
    %1512 = vmatpush1.bf16.msra.mxu0 %v151
    %1513 = vmatprep.subr.bf16.mxu0 0
    %1514 = vmatpush1.bf16.msra.mxu0 %v158
    %1515 = vmatprep.subr.bf16.mxu0 0
    %1516 = vmatpush1.bf16.msra.mxu0 %v165
    %1517 = vmatprep.subr.bf16.mxu0 0
    %1518 = vmatpush1.bf16.msra.mxu0 %v172
    %1519 = vmatprep.subr.bf16.mxu0 0
    %1520 = vmatpush1.bf16.msra.mxu0 %v179
    %1521 = vmatprep.subr.bf16.mxu0 0
    %1522 = vmatpush1.bf16.msra.mxu0 %v186
    %1523 = vmatprep.subr.bf16.mxu0 0
    %1524 = vmatpush1.bf16.msra.mxu0 %v193
    %1525 = vmatprep.subr.bf16.mxu0 0
    %1526 = vmatpush1.bf16.msra.mxu0 0
    %1527 = vmatprep.subr.bf16.mxu0 0
    %1528 = vmatpush1.bf16.msra.mxu0 0
    %1529 = vmatprep.subr.bf16.mxu0 0
    %1530 = vmatpush1.bf16.msra.mxu0 0
    %1531 = vmatprep.subr.bf16.mxu0 0
    %1532 = vmatpush1.bf16.msra.mxu0 0
    %1533 = vmatprep.subr.bf16.mxu0 0
    %1534 = vmatpush1.bf16.msra.mxu0 0
    %1535 = vmatprep.subr.bf16.mxu0 0
    %1536 = vmatpush1.bf16.msra.mxu0 0
    %1537 = vmatprep.subr.bf16.mxu0 0
    %1538 = vmatpush1.bf16.msra.mxu0 0
    %1539 = vmatprep.subr.bf16.mxu0 0
    %1540 = vmatpush1.bf16.msra.mxu0 0
    %1541 = vmatprep.mubr.bf16.mxu0 0
    %1542 = vmatmul.mubr.bf16.gmra.mrb[0].mxu0 %v386
    %v1543 = vpop.f32.mrb[0].mxu0
    %v1544 = vadd.f32 0.0, %v1543
    %v1545 = vpop.f32.mrb[0].mxu0
    %v1546 = vpop.f32.mrb[0].mxu0
    %v1547 = vadd.f32 0.0, %v1546
    %v1548 = vpop.f32.mrb[0].mxu0
    %1549 = vmatprep.mubr.bf16.mxu0 0
    %1550 = vmatmul.mubr.bf16.gmra.mrb[0].mxu0 %v387
    %v1551 = vpop.f32.mrb[0].mxu0
    %v1552 = vadd.f32 0.0, %v1551
    %v1553 = vpop.f32.mrb[0].mxu0
    %v1554 = vpop.f32.mrb[0].mxu0
    %v1555 = vadd.f32 0.0, %v1554
    %v1556 = vpop.f32.mrb[0].mxu0
    %1557 = vmatprep.mubr.bf16.mxu0 0
    %1558 = vmatmul.mubr.bf16.gmra.mrb[0].mxu0 %v388
    %v1559 = vpop.f32.mrb[0].mxu0
    %v1560 = vadd.f32 0.0, %v1559
    %v1561 = vpop.f32.mrb[0].mxu0
    %v1562 = vpop.f32.mrb[0].mxu0
    %v1563 = vadd.f32 0.0, %v1562
    %v1564 = vpop.f32.mrb[0].mxu0
    %1565 = vmatprep.mubr.bf16.mxu0 0
    %1566 = vmatmul.mubr.bf16.gmra.mrb[0].mxu0 %v389
    %v1567 = vpop.f32.mrb[0].mxu0
    %v1568 = vadd.f32 0.0, %v1567
    %v1569 = vpop.f32.mrb[0].mxu0
    %v1570 = vpop.f32.mrb[0].mxu0
    %v1571 = vadd.f32 0.0, %v1570
    %v1572 = vpop.f32.mrb[0].mxu0
    %1573 = vmatprep.mubr.bf16.mxu0 0
    %1574 = vmatmul.mubr.bf16.gmra.mrb[0].mxu0 %v390
    %v1575 = vpop.f32.mrb[0].mxu0
    %v1576 = vadd.f32 0.0, %v1575
    %v1577 = vpop.f32.mrb[0].mxu0
    %v1578 = vpop.f32.mrb[0].mxu0
    %v1579 = vadd.f32 0.0, %v1578
    %v1580 = vpop.f32.mrb[0].mxu0
    %1581 = vmatprep.mubr.bf16.mxu0 0
    %1582 = vmatmul.mubr.bf16.gmra.mrb[0].mxu0 %v391
    %v1583 = vpop.f32.mrb[0].mxu0
    %v1584 = vadd.f32 0.0, %v1583
    %v1585 = vpop.f32.mrb[0].mxu0
    %v1586 = vpop.f32.mrb[0].mxu0
    %v1587 = vadd.f32 0.0, %v1586
    %v1588 = vpop.f32.mrb[0].mxu0
    %1589 = vmatprep.mubr.bf16.mxu0 0
    %1590 = vmatmul.mubr.bf16.gmra.mrb[0].mxu0 %v392
    %v1591 = vpop.f32.mrb[0].mxu0
    %v1592 = vadd.f32 0.0, %v1591
    %v1593 = vpop.f32.mrb[0].mxu0
    %v1594 = vpop.f32.mrb[0].mxu0
    %v1595 = vadd.f32 0.0, %v1594
    %v1596 = vpop.f32.mrb[0].mxu0
    %1597 = vmatprep.mubr.bf16.mxu0 0
    %1598 = vmatmul.mubr.bf16.gmra.mrb[0].mxu0 %v393
    %v1599 = vpop.f32.mrb[0].mxu0
    %v1600 = vadd.f32 0.0, %v1599
    %v1601 = vpop.f32.mrb[0].mxu0
    %v1602 = vpop.f32.mrb[0].mxu0
    %v1603 = vadd.f32 0.0, %v1602
    %v1604 = vpop.f32.mrb[0].mxu0
    %1605 = vmatprep.mubr.bf16.mxu0 0
    %1606 = vmatmul.mubr.bf16.gmra.mrb[0].mxu0 %v394
    %v1607 = vpop.f32.mrb[0].mxu0
    %v1608 = vadd.f32 0.0, %v1607
    %v1609 = vpop.f32.mrb[0].mxu0
    %v1610 = vpop.f32.mrb[0].mxu0
    %v1611 = vadd.f32 0.0, %v1610
    %v1612 = vpop.f32.mrb[0].mxu0
    %1613 = vmatprep.mubr.bf16.mxu0 0
    %1614 = vmatmul.mubr.bf16.gmra.mrb[0].mxu0 %v395
    %v1615 = vpop.f32.mrb[0].mxu0
    %v1616 = vadd.f32 0.0, %v1615
    %v1617 = vpop.f32.mrb[0].mxu0
    %v1618 = vpop.f32.mrb[0].mxu0
    %v1619 = vadd.f32 0.0, %v1618
    %v1620 = vpop.f32.mrb[0].mxu0
    %1621 = vmatprep.mubr.bf16.mxu0 0
    %1622 = vmatmul.mubr.bf16.gmra.mrb[0].mxu0 %v396
    %v1623 = vpop.f32.mrb[0].mxu0
    %v1624 = vadd.f32 0.0, %v1623
    %v1625 = vpop.f32.mrb[0].mxu0
    %v1626 = vpop.f32.mrb[0].mxu0
    %v1627 = vadd.f32 0.0, %v1626
    %v1628 = vpop.f32.mrb[0].mxu0
    %1629 = vmatprep.mubr.bf16.mxu0 0
    %1630 = vmatmul.mubr.bf16.gmra.mrb[0].mxu0 %v397
    %v1631 = vpop.f32.mrb[0].mxu0
    %v1632 = vadd.f32 0.0, %v1631
    %v1633 = vpop.f32.mrb[0].mxu0
    %v1634 = vpop.f32.mrb[0].mxu0
    %v1635 = vadd.f32 0.0, %v1634
    %v1636 = vpop.f32.mrb[0].mxu0
    %1637 = vmatprep.mubr.bf16.mxu0 0
    %1638 = vmatmul.mubr.bf16.gmra.mrb[0].mxu0 %v398
    %v1639 = vpop.f32.mrb[0].mxu0
    %v1640 = vadd.f32 0.0, %v1639
    %v1641 = vpop.f32.mrb[0].mxu0
    %v1642 = vpop.f32.mrb[0].mxu0
    %v1643 = vadd.f32 0.0, %v1642
    %v1644 = vpop.f32.mrb[0].mxu0
    %1645 = vmatprep.mubr.bf16.mxu0 0
    %1646 = vmatmul.mubr.bf16.gmra.mrb[0].mxu0 %v399
    %v1647 = vpop.f32.mrb[0].mxu0
    %v1648 = vadd.f32 0.0, %v1647
    %v1649 = vpop.f32.mrb[0].mxu0
    %v1650 = vpop.f32.mrb[0].mxu0
    %v1651 = vadd.f32 0.0, %v1650
    %v1652 = vpop.f32.mrb[0].mxu0
    %1653 = vmatprep.mubr.bf16.mxu0 0
    %1654 = vmatmul.mubr.bf16.gmra.mrb[0].mxu0 %v400
    %v1655 = vpop.f32.mrb[0].mxu0
    %v1656 = vadd.f32 0.0, %v1655
    %v1657 = vpop.f32.mrb[0].mxu0
    %v1658 = vpop.f32.mrb[0].mxu0
    %v1659 = vadd.f32 0.0, %v1658
    %v1660 = vpop.f32.mrb[0].mxu0
    %1661 = vmatprep.mubr.bf16.mxu0 0
    %1662 = vmatmul.mubr.bf16.gmra.mrb[0].mxu0 %v401
    %v1663 = vpop.f32.mrb[0].mxu0
    %v1664 = vadd.f32 0.0, %v1663
    %v1665 = vpop.f32.mrb[0].mxu0
    %v1666 = vpop.f32.mrb[0].mxu0
    %v1667 = vadd.f32 0.0, %v1666
    %v1668 = vpop.f32.mrb[0].mxu0
    %1669 = vmatprep.mubr.bf16.mxu0 0
    %1670 = vmatmul.mubr.bf16.gmra.mrb[0].mxu0 %v402
    %v1671 = vpop.f32.mrb[0].mxu0
    %v1672 = vadd.f32 0.0, %v1671
    %v1673 = vpop.f32.mrb[0].mxu0
    %v1674 = vpop.f32.mrb[0].mxu0
    %v1675 = vadd.f32 0.0, %v1674
    %v1676 = vpop.f32.mrb[0].mxu0
    %1677 = vmatprep.mubr.bf16.mxu0 0
    %1678 = vmatmul.mubr.bf16.gmra.mrb[0].mxu0 %v403
    %v1679 = vpop.f32.mrb[0].mxu0
    %v1680 = vadd.f32 0.0, %v1679
    %v1681 = vpop.f32.mrb[0].mxu0
    %v1682 = vpop.f32.mrb[0].mxu0
    %v1683 = vadd.f32 0.0, %v1682
    %v1684 = vpop.f32.mrb[0].mxu0
    %1685 = vmatprep.mubr.bf16.mxu0 0
    %1686 = vmatmul.mubr.bf16.gmra.mrb[0].mxu0 %v404
    %v1687 = vpop.f32.mrb[0].mxu0
    %v1688 = vadd.f32 0.0, %v1687
    %v1689 = vpop.f32.mrb[0].mxu0
    %v1690 = vpop.f32.mrb[0].mxu0
    %v1691 = vadd.f32 0.0, %v1690
    %v1692 = vpop.f32.mrb[0].mxu0
    %1693 = vmatprep.mubr.bf16.mxu0 0
    %1694 = vmatmul.mubr.bf16.gmra.mrb[0].mxu0 %v405
    %v1695 = vpop.f32.mrb[0].mxu0
    %v1696 = vadd.f32 0.0, %v1695
    %v1697 = vpop.f32.mrb[0].mxu0
    %v1698 = vpop.f32.mrb[0].mxu0
    %v1699 = vadd.f32 0.0, %v1698
    %v1700 = vpop.f32.mrb[0].mxu0
    %1701 = vmatprep.mubr.bf16.mxu0 0
    %1702 = vmatmul.mubr.bf16.gmra.mrb[0].mxu0 %v406
    %v1703 = vpop.f32.mrb[0].mxu0
    %v1704 = vadd.f32 0.0, %v1703
    %v1705 = vpop.f32.mrb[0].mxu0
    %v1706 = vpop.f32.mrb[0].mxu0
    %v1707 = vadd.f32 0.0, %v1706
    %v1708 = vpop.f32.mrb[0].mxu0
    %1709 = vmatprep.mubr.bf16.mxu0 0
    %1710 = vmatmul.mubr.bf16.gmra.mrb[0].mxu0 %v407
    %v1711 = vpop.f32.mrb[0].mxu0
    %v1712 = vadd.f32 0.0, %v1711
    %v1713 = vpop.f32.mrb[0].mxu0
    %v1714 = vpop.f32.mrb[0].mxu0
    %v1715 = vadd.f32 0.0, %v1714
    %v1716 = vpop.f32.mrb[0].mxu0
    %1717 = vmatprep.mubr.bf16.mxu0 0
    %1718 = vmatmul.mubr.bf16.gmra.mrb[0].mxu0 %v408
    %v1719 = vpop.f32.mrb[0].mxu0
    %v1720 = vadd.f32 0.0, %v1719
    %v1721 = vpop.f32.mrb[0].mxu0
    %v1722 = vpop.f32.mrb[0].mxu0
    %v1723 = vadd.f32 0.0, %v1722
    %v1724 = vpop.f32.mrb[0].mxu0
    %1725 = vmatprep.mubr.bf16.mxu0 0
    %1726 = vmatmul.mubr.bf16.gmra.mrb[0].mxu0 %v409
    %v1727 = vpop.f32.mrb[0].mxu0
    %v1728 = vadd.f32 0.0, %v1727
    %v1729 = vpop.f32.mrb[0].mxu0
    %v1730 = vpop.f32.mrb[0].mxu0
    %v1731 = vadd.f32 0.0, %v1730
    %v1732 = vpop.f32.mrb[0].mxu0
    %1733 = vmatprep.mubr.bf16.mxu0 0
    %1734 = vmatmul.mubr.bf16.gmra.mrb[0].mxu0 %v410
    %v1735 = vpop.f32.mrb[0].mxu0
    %v1736 = vadd.f32 0.0, %v1735
    %v1737 = vpop.f32.mrb[0].mxu0
    %v1738 = vpop.f32.mrb[0].mxu0
    %v1739 = vadd.f32 0.0, %v1738
    %v1740 = vpop.f32.mrb[0].mxu0
    %1741 = vmatprep.mubr.bf16.mxu0 0
    %1742 = vmatmul.mubr.bf16.gmra.mrb[0].mxu0 %v411
    %v1743 = vpop.f32.mrb[0].mxu0
    %v1744 = vadd.f32 0.0, %v1743
    %v1745 = vpop.f32.mrb[0].mxu0
    %v1746 = vpop.f32.mrb[0].mxu0
    %v1747 = vadd.f32 0.0, %v1746
    %v1748 = vpop.f32.mrb[0].mxu0
    %1749 = vmatprep.mubr.bf16.mxu0 0
    %1750 = vmatmul.mubr.bf16.gmra.mrb[0].mxu0 %v412
    %v1751 = vpop.f32.mrb[0].mxu0
    %v1752 = vadd.f32 0.0, %v1751
    %v1753 = vpop.f32.mrb[0].mxu0
    %v1754 = vpop.f32.mrb[0].mxu0
    %v1755 = vadd.f32 0.0, %v1754
    %v1756 = vpop.f32.mrb[0].mxu0
    %1757 = vmatprep.mubr.bf16.mxu0 0
    %1758 = vmatmul.mubr.bf16.gmra.mrb[0].mxu0 %v413
    %v1759 = vpop.f32.mrb[0].mxu0
    %v1760 = vadd.f32 0.0, %v1759
    %v1761 = vpop.f32.mrb[0].mxu0
    %v1762 = vpop.f32.mrb[0].mxu0
    %v1763 = vadd.f32 0.0, %v1762
    %v1764 = vpop.f32.mrb[0].mxu0
    %1765 = vmatprep.mubr.bf16.mxu0 0
    %1766 = vmatmul.mubr.bf16.gmra.mrb[0].mxu0 %v414
    %v1767 = vpop.f32.mrb[0].mxu0
    %v1768 = vadd.f32 0.0, %v1767
    %v1769 = vpop.f32.mrb[0].mxu0
    %v1770 = vpop.f32.mrb[0].mxu0
    %v1771 = vadd.f32 0.0, %v1770
    %v1772 = vpop.f32.mrb[0].mxu0
    %1773 = vmatprep.mubr.bf16.mxu0 0
    %1774 = vmatmul.mubr.bf16.gmra.mrb[0].mxu0 %v415
    %v1775 = vpop.f32.mrb[0].mxu0
    %v1776 = vadd.f32 0.0, %v1775
    %v1777 = vpop.f32.mrb[0].mxu0
    %v1778 = vpop.f32.mrb[0].mxu0
    %v1779 = vadd.f32 0.0, %v1778
    %v1780 = vpop.f32.mrb[0].mxu0
    %1781 = vmatprep.mubr.bf16.mxu0 0
    %1782 = vmatmul.mubr.bf16.gmra.mrb[0].mxu0 %v416
    %v1783 = vpop.f32.mrb[0].mxu0
    %v1784 = vadd.f32 0.0, %v1783
    %v1785 = vpop.f32.mrb[0].mxu0
    %v1786 = vpop.f32.mrb[0].mxu0
    %v1787 = vadd.f32 0.0, %v1786
    %v1788 = vpop.f32.mrb[0].mxu0
    %1789 = vmatprep.mubr.bf16.mxu0 0
    %1790 = vmatmul.mubr.bf16.gmra.mrb[0].mxu0 %v417
    %v1791 = vpop.f32.mrb[0].mxu0
    %v1792 = vadd.f32 0.0, %v1791
    %v1793 = vpop.f32.mrb[0].mxu0
    %v1794 = vpop.f32.mrb[0].mxu0
    %v1795 = vadd.f32 0.0, %v1794
    %v1796 = vpop.f32.mrb[0].mxu0
    %1797 = vdwg.mxu0
    %1798 = vst [vmem:[%s2] sm:$0xff] %v485
    %1799 = vst [vmem:[%s2 + $0x8] sm:$0xff] %v487
    %1800 = vst [vmem:[%s2 + $0x10] sm:$0xff] %v838
    %1801 = vst [vmem:[%s2 + $0x18] sm:$0xff] %v840
    %1802 = vst [vmem:[%s2 + $0x20] sm:$0xff] %v1191
    %1803 = vst [vmem:[%s2 + $0x28] sm:$0xff] %v1193
    %vm1804 = vcmask 130048
    %1805 = vst.msk [vmem:[%s2 + $0x30] sm:$0xff] %vm1804, %v1544
    %1806 = vst [vmem:[%s2 + $0x38] sm:$0xff] %v489
    %1807 = vst [vmem:[%s2 + $0x40] sm:$0xff] %v491
    %1808 = vst [vmem:[%s2 + $0x48] sm:$0xff] %v842
    %1809 = vst [vmem:[%s2 + $0x50] sm:$0xff] %v844
    %1810 = vst [vmem:[%s2 + $0x58] sm:$0xff] %v1195
    %1811 = vst [vmem:[%s2 + $0x60] sm:$0xff] %v1197
    %1812 = vst.msk [vmem:[%s2 + $0x68] sm:$0xff] %vm1804, %v1547
    %1813 = vst [vmem:[%s2 + $0x70] sm:$0xff] %v495
    %1814 = vst [vmem:[%s2 + $0x78] sm:$0xff] %v497
    %1815 = vst [vmem:[%s2 + $0x80] sm:$0xff] %v848
    %1816 = vst [vmem:[%s2 + $0x88] sm:$0xff] %v850
    %1817 = vst [vmem:[%s2 + $0x90] sm:$0xff] %v1201
    %1818 = vst [vmem:[%s2 + $0x98] sm:$0xff] %v1203
    %1819 = vst.msk [vmem:[%s2 + $0xa0] sm:$0xff] %vm1804, %v1552
    %1820 = vst [vmem:[%s2 + $0xa8] sm:$0xff] %v499
    %1821 = vst [vmem:[%s2 + $0xb0] sm:$0xff] %v501
    %1822 = vst [vmem:[%s2 + $0xb8] sm:$0xff] %v852
    %1823 = vst [vmem:[%s2 + $0xc0] sm:$0xff] %v854
    %1824 = vst [vmem:[%s2 + $0xc8] sm:$0xff] %v1205
    %1825 = vst [vmem:[%s2 + $0xd0] sm:$0xff] %v1207
    %1826 = vst.msk [vmem:[%s2 + $0xd8] sm:$0xff] %vm1804, %v1555
    %1827 = vst [vmem:[%s2 + $0xe0] sm:$0xff] %v505
    %1828 = vst [vmem:[%s2 + $0xe8] sm:$0xff] %v507
    %1829 = vst [vmem:[%s2 + $0xf0] sm:$0xff] %v858
    %1830 = vst [vmem:[%s2 + $0xf8] sm:$0xff] %v860
    %1831 = vst [vmem:[%s2 + $0x100] sm:$0xff] %v1211
    %1832 = vst [vmem:[%s2 + $0x108] sm:$0xff] %v1213
    %1833 = vst.msk [vmem:[%s2 + $0x110] sm:$0xff] %vm1804, %v1560
    %1834 = vst [vmem:[%s2 + $0x118] sm:$0xff] %v509
    %1835 = vst [vmem:[%s2 + $0x120] sm:$0xff] %v511
    %1836 = vst [vmem:[%s2 + $0x128] sm:$0xff] %v862
    %1837 = vst [vmem:[%s2 + $0x130] sm:$0xff] %v864
    %1838 = vst [vmem:[%s2 + $0x138] sm:$0xff] %v1215
    %1839 = vst [vmem:[%s2 + $0x140] sm:$0xff] %v1217
    %1840 = vst.msk [vmem:[%s2 + $0x148] sm:$0xff] %vm1804, %v1563
    %1841 = vst [vmem:[%s2 + $0x150] sm:$0xff] %v515
    %1842 = vst [vmem:[%s2 + $0x158] sm:$0xff] %v517
    %1843 = vst [vmem:[%s2 + $0x160] sm:$0xff] %v868
    %1844 = vst [vmem:[%s2 + $0x168] sm:$0xff] %v870
    %1845 = vst [vmem:[%s2 + $0x170] sm:$0xff] %v1221
    %1846 = vst [vmem:[%s2 + $0x178] sm:$0xff] %v1223
    %1847 = vst.msk [vmem:[%s2 + $0x180] sm:$0xff] %vm1804, %v1568
    %1848 = vst [vmem:[%s2 + $0x188] sm:$0xff] %v519
    %1849 = vst [vmem:[%s2 + $0x190] sm:$0xff] %v521
    %1850 = vst [vmem:[%s2 + $0x198] sm:$0xff] %v872
    %1851 = vst [vmem:[%s2 + $0x1a0] sm:$0xff] %v874
    %1852 = vst [vmem:[%s2 + $0x1a8] sm:$0xff] %v1225
    %1853 = vst [vmem:[%s2 + $0x1b0] sm:$0xff] %v1227
    %1854 = vst.msk [vmem:[%s2 + $0x1b8] sm:$0xff] %vm1804, %v1571
    %1855 = vst [vmem:[%s2 + $0x1c0] sm:$0xff] %v525
    %1856 = vst [vmem:[%s2 + $0x1c8] sm:$0xff] %v527
    %1857 = vst [vmem:[%s2 + $0x1d0] sm:$0xff] %v878
    %1858 = vst [vmem:[%s2 + $0x1d8] sm:$0xff] %v880
    %1859 = vst [vmem:[%s2 + $0x1e0] sm:$0xff] %v1231
    %1860 = vst [vmem:[%s2 + $0x1e8] sm:$0xff] %v1233
    %1861 = vst.msk [vmem:[%s2 + $0x1f0] sm:$0xff] %vm1804, %v1576
    %1862 = vst [vmem:[%s2 + $0x1f8] sm:$0xff] %v529
    %1863 = vst [vmem:[%s2 + $0x200] sm:$0xff] %v531
    %1864 = vst [vmem:[%s2 + $0x208] sm:$0xff] %v882
    %1865 = vst [vmem:[%s2 + $0x210] sm:$0xff] %v884
    %1866 = vst [vmem:[%s2 + $0x218] sm:$0xff] %v1235
    %1867 = vst [vmem:[%s2 + $0x220] sm:$0xff] %v1237
    %1868 = vst.msk [vmem:[%s2 + $0x228] sm:$0xff] %vm1804, %v1579
    %1869 = vst [vmem:[%s2 + $0x230] sm:$0xff] %v535
    %1870 = vst [vmem:[%s2 + $0x238] sm:$0xff] %v537
    %1871 = vst [vmem:[%s2 + $0x240] sm:$0xff] %v888
    %1872 = vst [vmem:[%s2 + $0x248] sm:$0xff] %v890
    %1873 = vst [vmem:[%s2 + $0x250] sm:$0xff] %v1241
    %1874 = vst [vmem:[%s2 + $0x258] sm:$0xff] %v1243
    %1875 = vst.msk [vmem:[%s2 + $0x260] sm:$0xff] %vm1804, %v1584
    %1876 = vst [vmem:[%s2 + $0x268] sm:$0xff] %v539
    %1877 = vst [vmem:[%s2 + $0x270] sm:$0xff] %v541
    %1878 = vst [vmem:[%s2 + $0x278] sm:$0xff] %v892
    %1879 = vst [vmem:[%s2 + $0x280] sm:$0xff] %v894
    %1880 = vst [vmem:[%s2 + $0x288] sm:$0xff] %v1245
    %1881 = vst [vmem:[%s2 + $0x290] sm:$0xff] %v1247
    %1882 = vst.msk [vmem:[%s2 + $0x298] sm:$0xff] %vm1804, %v1587
    %1883 = vst [vmem:[%s2 + $0x2a0] sm:$0xff] %v545
    %1884 = vst [vmem:[%s2 + $0x2a8] sm:$0xff] %v547
    %1885 = vst [vmem:[%s2 + $0x2b0] sm:$0xff] %v898
    %1886 = vst [vmem:[%s2 + $0x2b8] sm:$0xff] %v900
    %1887 = vst [vmem:[%s2 + $0x2c0] sm:$0xff] %v1251
    %1888 = vst [vmem:[%s2 + $0x2c8] sm:$0xff] %v1253
    %1889 = vst.msk [vmem:[%s2 + $0x2d0] sm:$0xff] %vm1804, %v1592
    %1890 = vst [vmem:[%s2 + $0x2d8] sm:$0xff] %v549
    %1891 = vst [vmem:[%s2 + $0x2e0] sm:$0xff] %v551
    %1892 = vst [vmem:[%s2 + $0x2e8] sm:$0xff] %v902
    %1893 = vst [vmem:[%s2 + $0x2f0] sm:$0xff] %v904
    %1894 = vst [vmem:[%s2 + $0x2f8] sm:$0xff] %v1255
    %1895 = vst [vmem:[%s2 + $0x300] sm:$0xff] %v1257
    %1896 = vst.msk [vmem:[%s2 + $0x308] sm:$0xff] %vm1804, %v1595
    %1897 = vst [vmem:[%s2 + $0x310] sm:$0xff] %v555
    %1898 = vst [vmem:[%s2 + $0x318] sm:$0xff] %v557
    %1899 = vst [vmem:[%s2 + $0x320] sm:$0xff] %v908
    %1900 = vst [vmem:[%s2 + $0x328] sm:$0xff] %v910
    %1901 = vst [vmem:[%s2 + $0x330] sm:$0xff] %v1261
    %1902 = vst [vmem:[%s2 + $0x338] sm:$0xff] %v1263
    %1903 = vst.msk [vmem:[%s2 + $0x340] sm:$0xff] %vm1804, %v1600
    %1904 = vst [vmem:[%s2 + $0x348] sm:$0xff] %v559
    %1905 = vst [vmem:[%s2 + $0x350] sm:$0xff] %v561
    %1906 = vst [vmem:[%s2 + $0x358] sm:$0xff] %v912
    %1907 = vst [vmem:[%s2 + $0x360] sm:$0xff] %v914
    %1908 = vst [vmem:[%s2 + $0x368] sm:$0xff] %v1265
    %1909 = vst [vmem:[%s2 + $0x370] sm:$0xff] %v1267
    %1910 = vst.msk [vmem:[%s2 + $0x378] sm:$0xff] %vm1804, %v1603
    %1911 = vst [vmem:[%s2 + $0x380] sm:$0xff] %v565
    %1912 = vst [vmem:[%s2 + $0x388] sm:$0xff] %v567
    %1913 = vst [vmem:[%s2 + $0x390] sm:$0xff] %v918
    %1914 = vst [vmem:[%s2 + $0x398] sm:$0xff] %v920
    %1915 = vst [vmem:[%s2 + $0x3a0] sm:$0xff] %v1271
    %1916 = vst [vmem:[%s2 + $0x3a8] sm:$0xff] %v1273
    %1917 = vst.msk [vmem:[%s2 + $0x3b0] sm:$0xff] %vm1804, %v1608
    %1918 = vst [vmem:[%s2 + $0x3b8] sm:$0xff] %v569
    %1919 = vst [vmem:[%s2 + $0x3c0] sm:$0xff] %v571
    %1920 = vst [vmem:[%s2 + $0x3c8] sm:$0xff] %v922
    %1921 = vst [vmem:[%s2 + $0x3d0] sm:$0xff] %v924
    %1922 = vst [vmem:[%s2 + $0x3d8] sm:$0xff] %v1275
    %1923 = vst [vmem:[%s2 + $0x3e0] sm:$0xff] %v1277
    %1924 = vst.msk [vmem:[%s2 + $0x3e8] sm:$0xff] %vm1804, %v1611
    %1925 = vst [vmem:[%s2 + $0x3f0] sm:$0xff] %v575
    %1926 = vst [vmem:[%s2 + $0x3f8] sm:$0xff] %v577
    %1927 = vst [vmem:[%s2 + $0x400] sm:$0xff] %v928
    %1928 = vst [vmem:[%s2 + $0x408] sm:$0xff] %v930
    %1929 = vst [vmem:[%s2 + $0x410] sm:$0xff] %v1281
    %1930 = vst [vmem:[%s2 + $0x418] sm:$0xff] %v1283
    %1931 = vst.msk [vmem:[%s2 + $0x420] sm:$0xff] %vm1804, %v1616
    %1932 = vst [vmem:[%s2 + $0x428] sm:$0xff] %v579
    %1933 = vst [vmem:[%s2 + $0x430] sm:$0xff] %v581
    %1934 = vst [vmem:[%s2 + $0x438] sm:$0xff] %v932
    %1935 = vst [vmem:[%s2 + $0x440] sm:$0xff] %v934
    %1936 = vst [vmem:[%s2 + $0x448] sm:$0xff] %v1285
    %1937 = vst [vmem:[%s2 + $0x450] sm:$0xff] %v1287
    %1938 = vst.msk [vmem:[%s2 + $0x458] sm:$0xff] %vm1804, %v1619
    %1939 = vst [vmem:[%s2 + $0x460] sm:$0xff] %v585
    %1940 = vst [vmem:[%s2 + $0x468] sm:$0xff] %v587
    %1941 = vst [vmem:[%s2 + $0x470] sm:$0xff] %v938
    %1942 = vst [vmem:[%s2 + $0x478] sm:$0xff] %v940
    %1943 = vst [vmem:[%s2 + $0x480] sm:$0xff] %v1291
    %1944 = vst [vmem:[%s2 + $0x488] sm:$0xff] %v1293
    %1945 = vst.msk [vmem:[%s2 + $0x490] sm:$0xff] %vm1804, %v1624
    %1946 = vst [vmem:[%s2 + $0x498] sm:$0xff] %v589
    %1947 = vst [vmem:[%s2 + $0x4a0] sm:$0xff] %v591
    %1948 = vst [vmem:[%s2 + $0x4a8] sm:$0xff] %v942
    %1949 = vst [vmem:[%s2 + $0x4b0] sm:$0xff] %v944
    %1950 = vst [vmem:[%s2 + $0x4b8] sm:$0xff] %v1295
    %1951 = vst [vmem:[%s2 + $0x4c0] sm:$0xff] %v1297
    %1952 = vst.msk [vmem:[%s2 + $0x4c8] sm:$0xff] %vm1804, %v1627
    %1953 = vst [vmem:[%s2 + $0x4d0] sm:$0xff] %v595
    %1954 = vst [vmem:[%s2 + $0x4d8] sm:$0xff] %v597
    %1955 = vst [vmem:[%s2 + $0x4e0] sm:$0xff] %v948
    %1956 = vst [vmem:[%s2 + $0x4e8] sm:$0xff] %v950
    %1957 = vst [vmem:[%s2 + $0x4f0] sm:$0xff] %v1301
    %1958 = vst [vmem:[%s2 + $0x4f8] sm:$0xff] %v1303
    %1959 = vst.msk [vmem:[%s2 + $0x500] sm:$0xff] %vm1804, %v1632
    %1960 = vst [vmem:[%s2 + $0x508] sm:$0xff] %v599
    %1961 = vst [vmem:[%s2 + $0x510] sm:$0xff] %v601
    %1962 = vst [vmem:[%s2 + $0x518] sm:$0xff] %v952
    %1963 = vst [vmem:[%s2 + $0x520] sm:$0xff] %v954
    %1964 = vst [vmem:[%s2 + $0x528] sm:$0xff] %v1305
    %1965 = vst [vmem:[%s2 + $0x530] sm:$0xff] %v1307
    %1966 = vst.msk [vmem:[%s2 + $0x538] sm:$0xff] %vm1804, %v1635
    %1967 = vst [vmem:[%s2 + $0x540] sm:$0xff] %v605
    %1968 = vst [vmem:[%s2 + $0x548] sm:$0xff] %v607
    %1969 = vst [vmem:[%s2 + $0x550] sm:$0xff] %v958
    %1970 = vst [vmem:[%s2 + $0x558] sm:$0xff] %v960
    %1971 = vst [vmem:[%s2 + $0x560] sm:$0xff] %v1311
    %1972 = vst [vmem:[%s2 + $0x568] sm:$0xff] %v1313
    %1973 = vst.msk [vmem:[%s2 + $0x570] sm:$0xff] %vm1804, %v1640
    %1974 = vst [vmem:[%s2 + $0x578] sm:$0xff] %v609
    %1975 = vst [vmem:[%s2 + $0x580] sm:$0xff] %v611
    %1976 = vst [vmem:[%s2 + $0x588] sm:$0xff] %v962
    %1977 = vst [vmem:[%s2 + $0x590] sm:$0xff] %v964
    %1978 = vst [vmem:[%s2 + $0x598] sm:$0xff] %v1315
    %1979 = vst [vmem:[%s2 + $0x5a0] sm:$0xff] %v1317
    %1980 = vst.msk [vmem:[%s2 + $0x5a8] sm:$0xff] %vm1804, %v1643
    %1981 = vst [vmem:[%s2 + $0x5b0] sm:$0xff] %v615
    %1982 = vst [vmem:[%s2 + $0x5b8] sm:$0xff] %v617
    %1983 = vst [vmem:[%s2 + $0x5c0] sm:$0xff] %v968
    %1984 = vst [vmem:[%s2 + $0x5c8] sm:$0xff] %v970
    %1985 = vst [vmem:[%s2 + $0x5d0] sm:$0xff] %v1321
    %1986 = vst [vmem:[%s2 + $0x5d8] sm:$0xff] %v1323
    %1987 = vst.msk [vmem:[%s2 + $0x5e0] sm:$0xff] %vm1804, %v1648
    %1988 = vst [vmem:[%s2 + $0x5e8] sm:$0xff] %v619
    %1989 = vst [vmem:[%s2 + $0x5f0] sm:$0xff] %v621
    %1990 = vst [vmem:[%s2 + $0x5f8] sm:$0xff] %v972
    %1991 = vst [vmem:[%s2 + $0x600] sm:$0xff] %v974
    %1992 = vst [vmem:[%s2 + $0x608] sm:$0xff] %v1325
    %1993 = vst [vmem:[%s2 + $0x610] sm:$0xff] %v1327
    %1994 = vst.msk [vmem:[%s2 + $0x618] sm:$0xff] %vm1804, %v1651
    %1995 = vst [vmem:[%s2 + $0x620] sm:$0xff] %v625
    %1996 = vst [vmem:[%s2 + $0x628] sm:$0xff] %v627
    %1997 = vst [vmem:[%s2 + $0x630] sm:$0xff] %v978
    %1998 = vst [vmem:[%s2 + $0x638] sm:$0xff] %v980
    %1999 = vst [vmem:[%s2 + $0x640] sm:$0xff] %v1331
    %2000 = vst [vmem:[%s2 + $0x648] sm:$0xff] %v1333
    %2001 = vst.msk [vmem:[%s2 + $0x650] sm:$0xff] %vm1804, %v1656
    %2002 = vst [vmem:[%s2 + $0x658] sm:$0xff] %v629
    %2003 = vst [vmem:[%s2 + $0x660] sm:$0xff] %v631
    %2004 = vst [vmem:[%s2 + $0x668] sm:$0xff] %v982
    %2005 = vst [vmem:[%s2 + $0x670] sm:$0xff] %v984
    %2006 = vst [vmem:[%s2 + $0x678] sm:$0xff] %v1335
    %2007 = vst [vmem:[%s2 + $0x680] sm:$0xff] %v1337
    %2008 = vst.msk [vmem:[%s2 + $0x688] sm:$0xff] %vm1804, %v1659
    %2009 = vst [vmem:[%s2 + $0x690] sm:$0xff] %v635
    %2010 = vst [vmem:[%s2 + $0x698] sm:$0xff] %v637
    %2011 = vst [vmem:[%s2 + $0x6a0] sm:$0xff] %v988
    %2012 = vst [vmem:[%s2 + $0x6a8] sm:$0xff] %v990
    %2013 = vst [vmem:[%s2 + $0x6b0] sm:$0xff] %v1341
    %2014 = vst [vmem:[%s2 + $0x6b8] sm:$0xff] %v1343
    %2015 = vst.msk [vmem:[%s2 + $0x6c0] sm:$0xff] %vm1804, %v1664
    %2016 = vst [vmem:[%s2 + $0x6c8] sm:$0xff] %v639
    %2017 = vst [vmem:[%s2 + $0x6d0] sm:$0xff] %v641
    %2018 = vst [vmem:[%s2 + $0x6d8] sm:$0xff] %v992
    %2019 = vst [vmem:[%s2 + $0x6e0] sm:$0xff] %v994
    %2020 = vst [vmem:[%s2 + $0x6e8] sm:$0xff] %v1345
    %2021 = vst [vmem:[%s2 + $0x6f0] sm:$0xff] %v1347
    %2022 = vst.msk [vmem:[%s2 + $0x6f8] sm:$0xff] %vm1804, %v1667
    %2023 = vst [vmem:[%s2 + $0x700] sm:$0xff] %v645
    %2024 = vst [vmem:[%s2 + $0x708] sm:$0xff] %v647
    %2025 = vst [vmem:[%s2 + $0x710] sm:$0xff] %v998
    %2026 = vst [vmem:[%s2 + $0x718] sm:$0xff] %v1000
    %2027 = vst [vmem:[%s2 + $0x720] sm:$0xff] %v1351
    %2028 = vst [vmem:[%s2 + $0x728] sm:$0xff] %v1353
    %2029 = vst.msk [vmem:[%s2 + $0x730] sm:$0xff] %vm1804, %v1672
    %2030 = vst [vmem:[%s2 + $0x738] sm:$0xff] %v649
    %2031 = vst [vmem:[%s2 + $0x740] sm:$0xff] %v651
    %2032 = vst [vmem:[%s2 + $0x748] sm:$0xff] %v1002
    %2033 = vst [vmem:[%s2 + $0x750] sm:$0xff] %v1004
    %2034 = vst [vmem:[%s2 + $0x758] sm:$0xff] %v1355
    %2035 = vst [vmem:[%s2 + $0x760] sm:$0xff] %v1357
    %2036 = vst.msk [vmem:[%s2 + $0x768] sm:$0xff] %vm1804, %v1675
    %2037 = vst [vmem:[%s2 + $0x770] sm:$0xff] %v655
    %2038 = vst [vmem:[%s2 + $0x778] sm:$0xff] %v657
    %2039 = vst [vmem:[%s2 + $0x780] sm:$0xff] %v1008
    %2040 = vst [vmem:[%s2 + $0x788] sm:$0xff] %v1010
    %2041 = vst [vmem:[%s2 + $0x790] sm:$0xff] %v1361
    %2042 = vst [vmem:[%s2 + $0x798] sm:$0xff] %v1363
    %2043 = vst.msk [vmem:[%s2 + $0x7a0] sm:$0xff] %vm1804, %v1680
    %2044 = vst [vmem:[%s2 + $0x7a8] sm:$0xff] %v659
    %2045 = vst [vmem:[%s2 + $0x7b0] sm:$0xff] %v661
    %2046 = vst [vmem:[%s2 + $0x7b8] sm:$0xff] %v1012
    %2047 = vst [vmem:[%s2 + $0x7c0] sm:$0xff] %v1014
    %2048 = vst [vmem:[%s2 + $0x7c8] sm:$0xff] %v1365
    %2049 = vst [vmem:[%s2 + $0x7d0] sm:$0xff] %v1367
    %2050 = vst.msk [vmem:[%s2 + $0x7d8] sm:$0xff] %vm1804, %v1683
    %2051 = vst [vmem:[%s2 + $0x7e0] sm:$0xff] %v665
    %2052 = vst [vmem:[%s2 + $0x7e8] sm:$0xff] %v667
    %2053 = vst [vmem:[%s2 + $0x7f0] sm:$0xff] %v1018
    %2054 = vst [vmem:[%s2 + $0x7f8] sm:$0xff] %v1020
    %2055 = vst [vmem:[%s2 + $0x800] sm:$0xff] %v1371
    %2056 = vst [vmem:[%s2 + $0x808] sm:$0xff] %v1373
    %2057 = vst.msk [vmem:[%s2 + $0x810] sm:$0xff] %vm1804, %v1688
    %2058 = vst [vmem:[%s2 + $0x818] sm:$0xff] %v669
    %2059 = vst [vmem:[%s2 + $0x820] sm:$0xff] %v671
    %2060 = vst [vmem:[%s2 + $0x828] sm:$0xff] %v1022
    %2061 = vst [vmem:[%s2 + $0x830] sm:$0xff] %v1024
    %2062 = vst [vmem:[%s2 + $0x838] sm:$0xff] %v1375
    %2063 = vst [vmem:[%s2 + $0x840] sm:$0xff] %v1377
    %2064 = vst.msk [vmem:[%s2 + $0x848] sm:$0xff] %vm1804, %v1691
    %2065 = vst [vmem:[%s2 + $0x850] sm:$0xff] %v675
    %2066 = vst [vmem:[%s2 + $0x858] sm:$0xff] %v677
    %2067 = vst [vmem:[%s2 + $0x860] sm:$0xff] %v1028
    %2068 = vst [vmem:[%s2 + $0x868] sm:$0xff] %v1030
    %2069 = vst [vmem:[%s2 + $0x870] sm:$0xff] %v1381
    %2070 = vst [vmem:[%s2 + $0x878] sm:$0xff] %v1383
    %2071 = vst.msk [vmem:[%s2 + $0x880] sm:$0xff] %vm1804, %v1696
    %2072 = vst [vmem:[%s2 + $0x888] sm:$0xff] %v679
    %2073 = vst [vmem:[%s2 + $0x890] sm:$0xff] %v681
    %2074 = vst [vmem:[%s2 + $0x898] sm:$0xff] %v1032
    %2075 = vst [vmem:[%s2 + $0x8a0] sm:$0xff] %v1034
    %2076 = vst [vmem:[%s2 + $0x8a8] sm:$0xff] %v1385
    %2077 = vst [vmem:[%s2 + $0x8b0] sm:$0xff] %v1387
    %2078 = vst.msk [vmem:[%s2 + $0x8b8] sm:$0xff] %vm1804, %v1699
    %2079 = vst [vmem:[%s2 + $0x8c0] sm:$0xff] %v685
    %2080 = vst [vmem:[%s2 + $0x8c8] sm:$0xff] %v687
    %2081 = vst [vmem:[%s2 + $0x8d0] sm:$0xff] %v1038
    %2082 = vst [vmem:[%s2 + $0x8d8] sm:$0xff] %v1040
    %2083 = vst [vmem:[%s2 + $0x8e0] sm:$0xff] %v1391
    %2084 = vst [vmem:[%s2 + $0x8e8] sm:$0xff] %v1393
    %2085 = vst.msk [vmem:[%s2 + $0x8f0] sm:$0xff] %vm1804, %v1704
    %2086 = vst [vmem:[%s2 + $0x8f8] sm:$0xff] %v689
    %2087 = vst [vmem:[%s2 + $0x900] sm:$0xff] %v691
    %2088 = vst [vmem:[%s2 + $0x908] sm:$0xff] %v1042
    %2089 = vst [vmem:[%s2 + $0x910] sm:$0xff] %v1044
    %2090 = vst [vmem:[%s2 + $0x918] sm:$0xff] %v1395
    %2091 = vst [vmem:[%s2 + $0x920] sm:$0xff] %v1397
    %2092 = vst.msk [vmem:[%s2 + $0x928] sm:$0xff] %vm1804, %v1707
    %2093 = vst [vmem:[%s2 + $0x930] sm:$0xff] %v695
    %2094 = vst [vmem:[%s2 + $0x938] sm:$0xff] %v697
    %2095 = vst [vmem:[%s2 + $0x940] sm:$0xff] %v1048
    %2096 = vst [vmem:[%s2 + $0x948] sm:$0xff] %v1050
    %2097 = vst [vmem:[%s2 + $0x950] sm:$0xff] %v1401
    %2098 = vst [vmem:[%s2 + $0x958] sm:$0xff] %v1403
    %2099 = vst.msk [vmem:[%s2 + $0x960] sm:$0xff] %vm1804, %v1712
    %2100 = vst [vmem:[%s2 + $0x968] sm:$0xff] %v699
    %2101 = vst [vmem:[%s2 + $0x970] sm:$0xff] %v701
    %2102 = vst [vmem:[%s2 + $0x978] sm:$0xff] %v1052
    %2103 = vst [vmem:[%s2 + $0x980] sm:$0xff] %v1054
    %2104 = vst [vmem:[%s2 + $0x988] sm:$0xff] %v1405
    %2105 = vst [vmem:[%s2 + $0x990] sm:$0xff] %v1407
    %2106 = vst.msk [vmem:[%s2 + $0x998] sm:$0xff] %vm1804, %v1715
    %2107 = vst [vmem:[%s2 + $0x9a0] sm:$0xff] %v705
    %2108 = vst [vmem:[%s2 + $0x9a8] sm:$0xff] %v707
    %2109 = vst [vmem:[%s2 + $0x9b0] sm:$0xff] %v1058
    %2110 = vst [vmem:[%s2 + $0x9b8] sm:$0xff] %v1060
    %2111 = vst [vmem:[%s2 + $0x9c0] sm:$0xff] %v1411
    %2112 = vst [vmem:[%s2 + $0x9c8] sm:$0xff] %v1413
    %2113 = vst.msk [vmem:[%s2 + $0x9d0] sm:$0xff] %vm1804, %v1720
    %2114 = vst [vmem:[%s2 + $0x9d8] sm:$0xff] %v709
    %2115 = vst [vmem:[%s2 + $0x9e0] sm:$0xff] %v711
    %2116 = vst [vmem:[%s2 + $0x9e8] sm:$0xff] %v1062
    %2117 = vst [vmem:[%s2 + $0x9f0] sm:$0xff] %v1064
    %2118 = vst [vmem:[%s2 + $0x9f8] sm:$0xff] %v1415
    %2119 = vst [vmem:[%s2 + $0xa00] sm:$0xff] %v1417
    %2120 = vst.msk [vmem:[%s2 + $0xa08] sm:$0xff] %vm1804, %v1723
    %2121 = vst [vmem:[%s2 + $0xa10] sm:$0xff] %v715
    %2122 = vst [vmem:[%s2 + $0xa18] sm:$0xff] %v717
    %2123 = vst [vmem:[%s2 + $0xa20] sm:$0xff] %v1068
    %2124 = vst [vmem:[%s2 + $0xa28] sm:$0xff] %v1070
    %2125 = vst [vmem:[%s2 + $0xa30] sm:$0xff] %v1421
    %2126 = vst [vmem:[%s2 + $0xa38] sm:$0xff] %v1423
    %2127 = vst.msk [vmem:[%s2 + $0xa40] sm:$0xff] %vm1804, %v1728
    %2128 = vst [vmem:[%s2 + $0xa48] sm:$0xff] %v719
    %2129 = vst [vmem:[%s2 + $0xa50] sm:$0xff] %v721
    %2130 = vst [vmem:[%s2 + $0xa58] sm:$0xff] %v1072
    %2131 = vst [vmem:[%s2 + $0xa60] sm:$0xff] %v1074
    %2132 = vst [vmem:[%s2 + $0xa68] sm:$0xff] %v1425
    %2133 = vst [vmem:[%s2 + $0xa70] sm:$0xff] %v1427
    %2134 = vst.msk [vmem:[%s2 + $0xa78] sm:$0xff] %vm1804, %v1731
    %2135 = vst [vmem:[%s2 + $0xa80] sm:$0xff] %v725
    %2136 = vst [vmem:[%s2 + $0xa88] sm:$0xff] %v727
    %2137 = vst [vmem:[%s2 + $0xa90] sm:$0xff] %v1078
    %2138 = vst [vmem:[%s2 + $0xa98] sm:$0xff] %v1080
    %2139 = vst [vmem:[%s2 + $0xaa0] sm:$0xff] %v1431
    %2140 = vst [vmem:[%s2 + $0xaa8] sm:$0xff] %v1433
    %2141 = vst.msk [vmem:[%s2 + $0xab0] sm:$0xff] %vm1804, %v1736
    %2142 = vst [vmem:[%s2 + $0xab8] sm:$0xff] %v729
    %2143 = vst [vmem:[%s2 + $0xac0] sm:$0xff] %v731
    %2144 = vst [vmem:[%s2 + $0xac8] sm:$0xff] %v1082
    %2145 = vst [vmem:[%s2 + $0xad0] sm:$0xff] %v1084
    %2146 = vst [vmem:[%s2 + $0xad8] sm:$0xff] %v1435
    %2147 = vst [vmem:[%s2 + $0xae0] sm:$0xff] %v1437
    %2148 = vst.msk [vmem:[%s2 + $0xae8] sm:$0xff] %vm1804, %v1739
    %2149 = vst [vmem:[%s2 + $0xaf0] sm:$0xff] %v735
    %2150 = vst [vmem:[%s2 + $0xaf8] sm:$0xff] %v737
    %2151 = vst [vmem:[%s2 + $0xb00] sm:$0xff] %v1088
    %2152 = vst [vmem:[%s2 + $0xb08] sm:$0xff] %v1090
    %2153 = vst [vmem:[%s2 + $0xb10] sm:$0xff] %v1441
    %2154 = vst [vmem:[%s2 + $0xb18] sm:$0xff] %v1443
    %2155 = vst.msk [vmem:[%s2 + $0xb20] sm:$0xff] %vm1804, %v1744
    %2156 = vst [vmem:[%s2 + $0xb28] sm:$0xff] %v739
    %2157 = vst [vmem:[%s2 + $0xb30] sm:$0xff] %v741
    %2158 = vst [vmem:[%s2 + $0xb38] sm:$0xff] %v1092
    %2159 = vst [vmem:[%s2 + $0xb40] sm:$0xff] %v1094
    %2160 = vst [vmem:[%s2 + $0xb48] sm:$0xff] %v1445
    %2161 = vst [vmem:[%s2 + $0xb50] sm:$0xff] %v1447
    %2162 = vst.msk [vmem:[%s2 + $0xb58] sm:$0xff] %vm1804, %v1747
    %2163 = vst [vmem:[%s2 + $0xb60] sm:$0xff] %v745
    %2164 = vst [vmem:[%s2 + $0xb68] sm:$0xff] %v747
    %2165 = vst [vmem:[%s2 + $0xb70] sm:$0xff] %v1098
    %2166 = vst [vmem:[%s2 + $0xb78] sm:$0xff] %v1100
    %2167 = vst [vmem:[%s2 + $0xb80] sm:$0xff] %v1451
    %2168 = vst [vmem:[%s2 + $0xb88] sm:$0xff] %v1453
    %2169 = vst.msk [vmem:[%s2 + $0xb90] sm:$0xff] %vm1804, %v1752
    %2170 = vst [vmem:[%s2 + $0xb98] sm:$0xff] %v749
    %2171 = vst [vmem:[%s2 + $0xba0] sm:$0xff] %v751
    %2172 = vst [vmem:[%s2 + $0xba8] sm:$0xff] %v1102
    %2173 = vst [vmem:[%s2 + $0xbb0] sm:$0xff] %v1104
    %2174 = vst [vmem:[%s2 + $0xbb8] sm:$0xff] %v1455
    %2175 = vst [vmem:[%s2 + $0xbc0] sm:$0xff] %v1457
    %2176 = vst.msk [vmem:[%s2 + $0xbc8] sm:$0xff] %vm1804, %v1755
    %2177 = vst [vmem:[%s2 + $0xbd0] sm:$0xff] %v755
    %2178 = vst [vmem:[%s2 + $0xbd8] sm:$0xff] %v757
    %2179 = vst [vmem:[%s2 + $0xbe0] sm:$0xff] %v1108
    %2180 = vst [vmem:[%s2 + $0xbe8] sm:$0xff] %v1110
    %2181 = vst [vmem:[%s2 + $0xbf0] sm:$0xff] %v1461
    %2182 = vst [vmem:[%s2 + $0xbf8] sm:$0xff] %v1463
    %2183 = vst.msk [vmem:[%s2 + $0xc00] sm:$0xff] %vm1804, %v1760
    %2184 = vst [vmem:[%s2 + $0xc08] sm:$0xff] %v759
    %2185 = vst [vmem:[%s2 + $0xc10] sm:$0xff] %v761
    %2186 = vst [vmem:[%s2 + $0xc18] sm:$0xff] %v1112
    %2187 = vst [vmem:[%s2 + $0xc20] sm:$0xff] %v1114
    %2188 = vst [vmem:[%s2 + $0xc28] sm:$0xff] %v1465
    %2189 = vst [vmem:[%s2 + $0xc30] sm:$0xff] %v1467
    %2190 = vst.msk [vmem:[%s2 + $0xc38] sm:$0xff] %vm1804, %v1763
    %2191 = vst [vmem:[%s2 + $0xc40] sm:$0xff] %v765
    %2192 = vst [vmem:[%s2 + $0xc48] sm:$0xff] %v767
    %2193 = vst [vmem:[%s2 + $0xc50] sm:$0xff] %v1118
    %2194 = vst [vmem:[%s2 + $0xc58] sm:$0xff] %v1120
    %2195 = vst [vmem:[%s2 + $0xc60] sm:$0xff] %v1471
    %2196 = vst [vmem:[%s2 + $0xc68] sm:$0xff] %v1473
    %2197 = vst.msk [vmem:[%s2 + $0xc70] sm:$0xff] %vm1804, %v1768
    %2198 = vst [vmem:[%s2 + $0xc78] sm:$0xff] %v769
    %2199 = vst [vmem:[%s2 + $0xc80] sm:$0xff] %v771
    %2200 = vst [vmem:[%s2 + $0xc88] sm:$0xff] %v1122
    %2201 = vst [vmem:[%s2 + $0xc90] sm:$0xff] %v1124
    %2202 = vst [vmem:[%s2 + $0xc98] sm:$0xff] %v1475
    %2203 = vst [vmem:[%s2 + $0xca0] sm:$0xff] %v1477
    %2204 = vst.msk [vmem:[%s2 + $0xca8] sm:$0xff] %vm1804, %v1771
    %2205 = vst [vmem:[%s2 + $0xcb0] sm:$0xff] %v775
    %2206 = vst [vmem:[%s2 + $0xcb8] sm:$0xff] %v777
    %2207 = vst [vmem:[%s2 + $0xcc0] sm:$0xff] %v1128
    %2208 = vst [vmem:[%s2 + $0xcc8] sm:$0xff] %v1130
    %2209 = vst [vmem:[%s2 + $0xcd0] sm:$0xff] %v1481
    %2210 = vst [vmem:[%s2 + $0xcd8] sm:$0xff] %v1483
    %2211 = vst.msk [vmem:[%s2 + $0xce0] sm:$0xff] %vm1804, %v1776
    %2212 = vst [vmem:[%s2 + $0xce8] sm:$0xff] %v779
    %2213 = vst [vmem:[%s2 + $0xcf0] sm:$0xff] %v781
    %2214 = vst [vmem:[%s2 + $0xcf8] sm:$0xff] %v1132
    %2215 = vst [vmem:[%s2 + $0xd00] sm:$0xff] %v1134
    %2216 = vst [vmem:[%s2 + $0xd08] sm:$0xff] %v1485
    %2217 = vst [vmem:[%s2 + $0xd10] sm:$0xff] %v1487
    %2218 = vst.msk [vmem:[%s2 + $0xd18] sm:$0xff] %vm1804, %v1779
    %2219 = vst [vmem:[%s2 + $0xd20] sm:$0xff] %v785
    %2220 = vst [vmem:[%s2 + $0xd28] sm:$0xff] %v787
    %2221 = vst [vmem:[%s2 + $0xd30] sm:$0xff] %v1138
    %2222 = vst [vmem:[%s2 + $0xd38] sm:$0xff] %v1140
    %2223 = vst [vmem:[%s2 + $0xd40] sm:$0xff] %v1491
    %2224 = vst [vmem:[%s2 + $0xd48] sm:$0xff] %v1493
    %2225 = vst.msk [vmem:[%s2 + $0xd50] sm:$0xff] %vm1804, %v1784
    %2226 = vst [vmem:[%s2 + $0xd58] sm:$0xff] %v789
    %2227 = vst [vmem:[%s2 + $0xd60] sm:$0xff] %v791
    %2228 = vst [vmem:[%s2 + $0xd68] sm:$0xff] %v1142
    %2229 = vst [vmem:[%s2 + $0xd70] sm:$0xff] %v1144
    %2230 = vst [vmem:[%s2 + $0xd78] sm:$0xff] %v1495
    %2231 = vst [vmem:[%s2 + $0xd80] sm:$0xff] %v1497
    %2232 = vst.msk [vmem:[%s2 + $0xd88] sm:$0xff] %vm1804, %v1787
    %2233 = vst [vmem:[%s2 + $0xd90] sm:$0xff] %v795
    %2234 = vst [vmem:[%s2 + $0xd98] sm:$0xff] %v797
    %2235 = vst [vmem:[%s2 + $0xda0] sm:$0xff] %v1148
    %2236 = vst [vmem:[%s2 + $0xda8] sm:$0xff] %v1150
    %2237 = vst [vmem:[%s2 + $0xdb0] sm:$0xff] %v1501
    %2238 = vst [vmem:[%s2 + $0xdb8] sm:$0xff] %v1503
    %2239 = vst.msk [vmem:[%s2 + $0xdc0] sm:$0xff] %vm1804, %v1792
    %2240 = vst [vmem:[%s2 + $0xdc8] sm:$0xff] %v799
    %2241 = vst [vmem:[%s2 + $0xdd0] sm:$0xff] %v801
    %2242 = vst [vmem:[%s2 + $0xdd8] sm:$0xff] %v1152
    %2243 = vst [vmem:[%s2 + $0xde0] sm:$0xff] %v1154
    %2244 = vst [vmem:[%s2 + $0xde8] sm:$0xff] %v1505
    %2245 = vst [vmem:[%s2 + $0xdf0] sm:$0xff] %v1507
    %2246 = vst.msk [vmem:[%s2 + $0xdf8] sm:$0xff] %vm1804, %v1795
    // Predicated region
    $region14: #{tpu_custom_call.1} parent=1 // pred_check
      _
    $region15: #{tpu_custom_call.1} parent=1 // pred_check_branch
      %2248 = sbr.rel (0) target = $region17
    $region16: #{tpu_custom_call.1} parent=1 // pred_region
      _
    $region17: #{tpu_custom_call.1} parent=1 // pred_fallthru
      _
    // Predicated region
    $region18: #{tpu_custom_call.1} parent=1 // pred_check
      _
    $region19: #{tpu_custom_call.1} parent=1 // pred_check_branch
      %2250 = sbr.rel (0) target = $region21
    $region20: #{tpu_custom_call.1} parent=1 // pred_region
      _
    $region21: #{tpu_custom_call.1} parent=1 // pred_fallthru
      _
    %2251 = vsyncpa [#allocation3], 1

</llo_original>
